<compile_context>
chip_gen: v5e
topology: v5e:2x2
jax: 0.10.0
libtpu: 0.0.40
codegen_flags: <defaults>
</compile_context>

<pallas_src>
import functools

import jax
import jax.numpy as jnp
from jax.experimental import pallas as pl
from jax.experimental.pallas import tpu as pltpu


MAX_TILE = 32768            # lanes per grid step; (8, 32768) f32 block = 1 MiB
VPU_MAX_CONTRACTION = 16    # use the VPU MAC path when contraction dim <= this
XLA_FALLBACK_BYTES = 1 << 20  # below this, three pallas_calls are pure overhead


def _pick_tile(hw):
    if hw <= MAX_TILE:
        return hw           # full last dim -> always a legal block shape
    return MAX_TILE         # multiple of 128; ragged tail handled in-kernel


def _small_matmul(w, x, use_vpu):
    """w @ x for a small (Cout, Cin) weight against a lane-dense (Cin, T) tile.

    use_vpu=True: unrolled broadcast-multiply-accumulate on the VPU (exact f32,
    no MXU round-trip -- at Cin<=16 the MXU is <1% utilized and its push/pop
    cadence would dominate the per-tile cost on v6e/v7x).
    use_vpu=False: MXU dot with explicitly pinned f32 precision.
    """
    if use_vpu:
        cin = w.shape[1]
        acc = w[:, 0:1] * x[0:1, :]
        for c in range(1, cin):
            acc = acc + w[:, c:c + 1] * x[c:c + 1, :]
        return acc
    return jnp.dot(w, x, preferred_element_type=jnp.float32,
                   precision=jax.lax.Precision.HIGHEST)


def _accum_stats(s_ref, v):
    s_ref[...] += jnp.concatenate(
        [jnp.sum(v, axis=1, keepdims=True),
         jnp.sum(v * v, axis=1, keepdims=True)], axis=1)


def _accum_stats_masked(s_ref, v, t, hw, tile):
    """Accumulate [sum, sumsq]; the ragged-tail mask is only paid on the last
    tile (and does not exist at all when hw is tile-aligned)."""
    if hw % tile == 0:
        _accum_stats(s_ref, v)
    else:
        last = pl.num_programs(1) - 1

        @pl.when(t != last)
        def _():
            _accum_stats(s_ref, v)

        @pl.when(t == last)
        def _():
            lane = jax.lax.broadcasted_iota(jnp.int32, v.shape, 1)
            _accum_stats(s_ref, jnp.where(t * tile + lane < hw, v, 0.0))


# --------- pass 1: per-image per-channel [sum, sumsq] of h = conv1(x) --------
def _stats_h_kernel(x_ref, w1_ref, s_ref, *, hw, tile, use_vpu):
    t = pl.program_id(1)

    @pl.when(t == 0)
    def _():
        s_ref[...] = jnp.zeros_like(s_ref)

    x = x_ref[...].astype(jnp.float32)                          # (Cin, T)
    h = _small_matmul(w1_ref[...].astype(jnp.float32), x, use_vpu)
    _accum_stats_masked(s_ref, h, t, hw, tile)


# -- pass 2: stats of y = conv2(relu(bn1(conv1 x))); also stage y to HBM ------
def _stats_y_kernel(x_ref, w1f_ref, c1_ref, w2_ref, s_ref, y_ref,
                    *, hw, tile, use_vpu):
    t = pl.program_id(1)

    @pl.when(t == 0)
    def _():
        s_ref[...] = jnp.zeros_like(s_ref)

    x = x_ref[...].astype(jnp.float32)                          # (Cin, T)
    h = jnp.maximum(
        _small_matmul(w1f_ref[...].astype(jnp.float32), x, use_vpu)
        + c1_ref[...].astype(jnp.float32), 0.0)
    y = _small_matmul(w2_ref[...].astype(jnp.float32), h, use_vpu)  # (Ncls, T)
    y_ref[...] = y.astype(y_ref.dtype)                          # stage pre-BN2 y
    _accum_stats_masked(s_ref, y, t, hw, tile)


# --------- pass 3: elementwise folded BN2 + ReLU over the staged y -----------
def _bn_relu_kernel(y_ref, a2_ref, c2_ref, o_ref):
    y = y_ref[...].astype(jnp.float32)
    o_ref[...] = jnp.maximum(a2_ref[...] * y + c2_ref[...], 0.0).astype(o_ref.dtype)


def _fused_xla_forward(x_nchw, w1, g1, b1, w2, g2, b2, eps=1e-5):
    """Pure-XLA path mirroring the PyTorch forward (training-mode BN).
    Used both as the tiny-problem fallback and as the test reference."""
    hp = jax.lax.Precision.HIGHEST

    def bn_relu(y, g, b):
        m = jnp.mean(y, axis=(0, 2, 3), keepdims=True)
        v = jnp.mean((y - m) ** 2, axis=(0, 2, 3), keepdims=True)
        y = (y - m) / jnp.sqrt(v + eps) * g.reshape(1, -1, 1, 1) + b.reshape(1, -1, 1, 1)
        return jnp.maximum(y, 0.0)

    h = jnp.einsum('nchw,oc->nohw', x_nchw, w1, precision=hp)   # 1x1 conv
    h = bn_relu(h, g1, b1)
    y = jnp.einsum('nchw,oc->nohw', h, w2, precision=hp)
    return bn_relu(y, g2, b2)


def pixel_map_estimator_bn(x_nchw, w1, g1, b1, w2, g2, b2, eps=1e-5,
                           *, force_pallas=False):
    """x_nchw: (N, C, H, W).  Conv weights in PyTorch (out, in) orientation
    (1x1 kernels squeezed): w1: (C, C), w2: (num_class, C).  g*/b*: BN affine."""
    N, C, H, W = x_nchw.shape
    num_class = w2.shape[0]
    HW = H * W
    M = N * HW

    # Tiny problems: Pallas launch overhead dominates -> fused XLA path.
    if (not force_pallas) and x_nchw.size * x_nchw.dtype.itemsize < XLA_FALLBACK_BYTES:
        return _fused_xla_forward(x_nchw, w1, g1, b1, w2, g2, b2, eps)

    tile = _pick_tile(HW)
    n_t = pl.cdiv(HW, tile)
    use_vpu = C <= VPU_MAX_CONTRACTION

    x3 = x_nchw.reshape(N, C, HW)       # free, contiguous reshape

    cp_reduce = pltpu.CompilerParams(
        dimension_semantics=("parallel", "arbitrary"),
        vmem_limit_bytes=32 * 1024 * 1024)
    cp_map = pltpu.CompilerParams(
        dimension_semantics=("parallel", "parallel"),
        vmem_limit_bytes=32 * 1024 * 1024)

    x_spec = pl.BlockSpec((pl.Squeezed(), C, tile), lambda n, t: (n, 0, t))
    y_spec = pl.BlockSpec((pl.Squeezed(), num_class, tile), lambda n, t: (n, 0, t))

    def const_spec(shape):   # small weights: resident in VMEM across the grid
        return pl.BlockSpec(shape, lambda n, t: (0,) * len(shape))

    f32 = jnp.float32

    # ---------------- pass 1: BN1 batch statistics ---------------------------
    stats1 = pl.pallas_call(
        functools.partial(_stats_h_kernel, hw=HW, tile=tile, use_vpu=use_vpu),
        out_shape=jax.ShapeDtypeStruct((N, C, 2), f32),
        grid=(N, n_t),
        in_specs=[x_spec, const_spec((C, C))],
        out_specs=pl.BlockSpec((pl.Squeezed(), C, 2), lambda n, t: (n, 0, 0)),
        compiler_params=cp_reduce,
    )(x3, w1)

    # NOTE: single-pass sum/sumsq variance in f32; fine at these sizes, switch
    # to mean-shifted / Welford combines if N*H*W gets very large.
    s1 = jnp.sum(stats1, axis=0)                        # (C, 2)
    mean1 = s1[:, 0] / M
    var1 = jnp.maximum(s1[:, 1] / M - mean1 * mean1, 0.0)   # biased var (BN fwd)
    a1 = g1 * jax.lax.rsqrt(var1 + eps)
    c1 = b1 - mean1 * a1
    w1f = a1[:, None] * w1                              # fold BN1 scale into conv1
    c1v = c1[:, None]                                   # (C, 1)

    # ---------------- pass 2: BN2 batch statistics + stage y -----------------
    stats2, y_pre = pl.pallas_call(
        functools.partial(_stats_y_kernel, hw=HW, tile=tile, use_vpu=use_vpu),
        out_shape=(jax.ShapeDtypeStruct((N, num_class, 2), f32),
                   jax.ShapeDtypeStruct((N, num_class, HW), f32)),
        grid=(N, n_t),
        in_specs=[x_spec, const_spec((C, C)), const_spec((C, 1)),
                  const_spec((num_class, C))],
        out_specs=[pl.BlockSpec((pl.Squeezed(), num_class, 2),
                                lambda n, t: (n, 0, 0)),
                   y_spec],
        compiler_params=cp_reduce,
    )(x3, w1f, c1v, w2)

    s2 = jnp.sum(stats2, axis=0)                        # (num_class, 2)
    mean2 = s2[:, 0] / M
    var2 = jnp.maximum(s2[:, 1] / M - mean2 * mean2, 0.0)
    a2 = g2 * jax.lax.rsqrt(var2 + eps)
    c2 = b2 - mean2 * a2
    a2v = a2[:, None]                                   # (num_class, 1)
    c2v = c2[:, None]

    # ------ pass 3: elementwise folded BN2 + ReLU, in place over staged y ----
    out3 = pl.pallas_call(
        _bn_relu_kernel,
        out_shape=jax.ShapeDtypeStruct((N, num_class, HW), f32),
        grid=(N, n_t),
        in_specs=[y_spec, const_spec((num_class, 1)), const_spec((num_class, 1))],
        out_specs=y_spec,
        input_output_aliases={0: 0},        # write the output over y_pre
        compiler_params=cp_map,
    )(y_pre, a2v, c2v)

    return out3.reshape(N, num_class, H, W)             # free reshape back to NCHW


if __name__ == "__main__":
    in_chn, num_class = 8, 4
    N, H, W = 2, 16, 16

    key = jax.random.PRNGKey(0)
    k_x, k_w1, k_w2, k_g1, k_b1, k_g2, k_b2 = jax.random.split(key, 7)

    x = jax.random.normal(k_x, (N, in_chn, H, W), dtype=jnp.float32)
    # Conv weights in PyTorch (out_channels, in_channels) orientation (1x1 squeezed).
    w1 = jax.random.normal(k_w1, (in_chn, in_chn), dtype=jnp.float32) * 0.1
    w2 = jax.random.normal(k_w2, (num_class, in_chn), dtype=jnp.float32) * 0.1
    # BatchNorm affine params (deterministic, non-trivial).
    g1 = 1.0 + 0.1 * jax.random.normal(k_g1, (in_chn,), dtype=jnp.float32)
    b1 = 0.1 * jax.random.normal(k_b1, (in_chn,), dtype=jnp.float32)
    g2 = 1.0 + 0.1 * jax.random.normal(k_g2, (num_class,), dtype=jnp.float32)
    b2 = 0.1 * jax.random.normal(k_b2, (num_class,), dtype=jnp.float32)

    # force_pallas=True so this small smoke test exercises the Pallas path
    # rather than the tiny-problem XLA fallback.
    fwd = jax.jit(functools.partial(pixel_map_estimator_bn, force_pallas=True))
    out = jax.block_until_ready(fwd(x, w1, g1, b1, w2, g2, b2))
    ref = jax.block_until_ready(
        jax.jit(_fused_xla_forward)(x, w1, g1, b1, w2, g2, b2))

    assert out.shape == (N, num_class, H, W)
    assert jnp.allclose(out, ref, atol=1e-4, rtol=1e-4), "mismatch vs reference"

    print("KERNEL_OK")
</pallas_src>

<mosaic_0001>
module attributes {stable_mosaic.version = 11 : i64} {
  func.func @_stats_h_kernel(%arg0: i32, %arg1: i32, %arg2: memref<1x8x256xf32, #tpu.memory_space<vmem>>, %arg3: memref<8x8xf32, #tpu.memory_space<vmem>>, %arg4: memref<1x8x2xf32, #tpu.memory_space<vmem>>) attributes {dimension_semantics = [#tpu.dimension_semantics<parallel>, #tpu.dimension_semantics<arbitrary>], iteration_bounds = array<i64: 2, 1>, scalar_prefetch = 0 : i64, scratch_operands = 0 : i64, tpu.core_type = #tpu.core_type<tc>, window_params = [{transform_indices = @transform_0, window_bounds = array<i64: 1, 8, 256>}, {pipeline_mode = #tpu.pipeline_mode<synchronous>, transform_indices = @transform_1, window_bounds = array<i64: 8, 8>}, {transform_indices = @transform_2, window_bounds = array<i64: 1, 8, 2>}]} {
    %c0_i32 = arith.constant 0 : i32
    %0 = arith.cmpi eq, %arg1, %c0_i32 : i32
    %1 = arith.extui %0 : i1 to i32
    %c0_i32_0 = arith.constant 0 : i32
    %2 = arith.cmpi ne, %1, %c0_i32_0 : i32
    scf.if %2 {
      %cst_12 = arith.constant 0.000000e+00 : f32
      %65 = vector.broadcast %cst_12 : f32 to vector<8x2xf32>
      %c0_13 = arith.constant 0 : index
      %c0_14 = arith.constant 0 : index
      %c0_15 = arith.constant 0 : index
      %66 = vector.load %arg4[%c0_13, %c0_14, %c0_15] : memref<1x8x2xf32, #tpu.memory_space<vmem>>, vector<1x8x2xf32>
      %67 = vector.shape_cast %66 : vector<1x8x2xf32> to vector<8x2xf32>
      %68 = vector.shape_cast %65 : vector<8x2xf32> to vector<1x8x2xf32>
      tpu.vector_store %arg4[%c0_13, %c0_14, %c0_15], %68 {strides = array<i32>} : memref<1x8x2xf32, #tpu.memory_space<vmem>>, vector<1x8x2xf32>,
    } else {
    }
    %c0 = arith.constant 0 : index
    %c0_1 = arith.constant 0 : index
    %c0_2 = arith.constant 0 : index
    %3 = vector.load %arg2[%c0, %c0_1, %c0_2] : memref<1x8x256xf32, #tpu.memory_space<vmem>>, vector<1x8x256xf32>
    %4 = vector.shape_cast %3 : vector<1x8x256xf32> to vector<8x256xf32>
    %c0_3 = arith.constant 0 : index
    %c0_4 = arith.constant 0 : index
    %5 = vector.load %arg3[%c0_3, %c0_4] : memref<8x8xf32, #tpu.memory_space<vmem>>, vector<8x8xf32>
    %6 = vector.extract_strided_slice %5 {offsets = [0, 0], sizes = [8, 1], strides = [1, 1]} : vector<8x8xf32> to vector<8x1xf32>
    %7 = vector.extract_strided_slice %4 {offsets = [0, 0], sizes = [1, 256], strides = [1, 1]} : vector<8x256xf32> to vector<1x256xf32>
    %8 = vector.broadcast %6 : vector<8x1xf32> to vector<8x256xf32>
    %9 = vector.broadcast %7 : vector<1x256xf32> to vector<8x256xf32>
    %10 = arith.mulf %8, %9 : vector<8x256xf32>
    %11 = vector.extract_strided_slice %5 {offsets = [0, 1], sizes = [8, 1], strides = [1, 1]} : vector<8x8xf32> to vector<8x1xf32>
    %12 = vector.extract_strided_slice %4 {offsets = [1, 0], sizes = [1, 256], strides = [1, 1]} : vector<8x256xf32> to vector<1x256xf32>
    %13 = vector.broadcast %11 : vector<8x1xf32> to vector<8x256xf32>
    %14 = vector.broadcast %12 : vector<1x256xf32> to vector<8x256xf32>
    %15 = arith.mulf %13, %14 : vector<8x256xf32>
    %16 = arith.addf %10, %15 : vector<8x256xf32>
    %17 = vector.extract_strided_slice %5 {offsets = [0, 2], sizes = [8, 1], strides = [1, 1]} : vector<8x8xf32> to vector<8x1xf32>
    %18 = vector.extract_strided_slice %4 {offsets = [2, 0], sizes = [1, 256], strides = [1, 1]} : vector<8x256xf32> to vector<1x256xf32>
    %19 = vector.broadcast %17 : vector<8x1xf32> to vector<8x256xf32>
    %20 = vector.broadcast %18 : vector<1x256xf32> to vector<8x256xf32>
    %21 = arith.mulf %19, %20 : vector<8x256xf32>
    %22 = arith.addf %16, %21 : vector<8x256xf32>
    %23 = vector.extract_strided_slice %5 {offsets = [0, 3], sizes = [8, 1], strides = [1, 1]} : vector<8x8xf32> to vector<8x1xf32>
    %24 = vector.extract_strided_slice %4 {offsets = [3, 0], sizes = [1, 256], strides = [1, 1]} : vector<8x256xf32> to vector<1x256xf32>
    %25 = vector.broadcast %23 : vector<8x1xf32> to vector<8x256xf32>
    %26 = vector.broadcast %24 : vector<1x256xf32> to vector<8x256xf32>
    %27 = arith.mulf %25, %26 : vector<8x256xf32>
    %28 = arith.addf %22, %27 : vector<8x256xf32>
    %29 = vector.extract_strided_slice %5 {offsets = [0, 4], sizes = [8, 1], strides = [1, 1]} : vector<8x8xf32> to vector<8x1xf32>
    %30 = vector.extract_strided_slice %4 {offsets = [4, 0], sizes = [1, 256], strides = [1, 1]} : vector<8x256xf32> to vector<1x256xf32>
    %31 = vector.broadcast %29 : vector<8x1xf32> to vector<8x256xf32>
    %32 = vector.broadcast %30 : vector<1x256xf32> to vector<8x256xf32>
    %33 = arith.mulf %31, %32 : vector<8x256xf32>
    %34 = arith.addf %28, %33 : vector<8x256xf32>
    %35 = vector.extract_strided_slice %5 {offsets = [0, 5], sizes = [8, 1], strides = [1, 1]} : vector<8x8xf32> to vector<8x1xf32>
    %36 = vector.extract_strided_slice %4 {offsets = [5, 0], sizes = [1, 256], strides = [1, 1]} : vector<8x256xf32> to vector<1x256xf32>
    %37 = vector.broadcast %35 : vector<8x1xf32> to vector<8x256xf32>
    %38 = vector.broadcast %36 : vector<1x256xf32> to vector<8x256xf32>
    %39 = arith.mulf %37, %38 : vector<8x256xf32>
    %40 = arith.addf %34, %39 : vector<8x256xf32>
    %41 = vector.extract_strided_slice %5 {offsets = [0, 6], sizes = [8, 1], strides = [1, 1]} : vector<8x8xf32> to vector<8x1xf32>
    %42 = vector.extract_strided_slice %4 {offsets = [6, 0], sizes = [1, 256], strides = [1, 1]} : vector<8x256xf32> to vector<1x256xf32>
    %43 = vector.broadcast %41 : vector<8x1xf32> to vector<8x256xf32>
    %44 = vector.broadcast %42 : vector<1x256xf32> to vector<8x256xf32>
    %45 = arith.mulf %43, %44 : vector<8x256xf32>
    %46 = arith.addf %40, %45 : vector<8x256xf32>
    %47 = vector.extract_strided_slice %5 {offsets = [0, 7], sizes = [8, 1], strides = [1, 1]} : vector<8x8xf32> to vector<8x1xf32>
    %48 = vector.extract_strided_slice %4 {offsets = [7, 0], sizes = [1, 256], strides = [1, 1]} : vector<8x256xf32> to vector<1x256xf32>
    %49 = vector.broadcast %47 : vector<8x1xf32> to vector<8x256xf32>
    %50 = vector.broadcast %48 : vector<1x256xf32> to vector<8x256xf32>
    %51 = arith.mulf %49, %50 : vector<8x256xf32>
    %52 = arith.addf %46, %51 : vector<8x256xf32>
    %c0_5 = arith.constant 0 : index
    %c0_6 = arith.constant 0 : index
    %c0_7 = arith.constant 0 : index
    %53 = vector.load %arg4[%c0_5, %c0_6, %c0_7] : memref<1x8x2xf32, #tpu.memory_space<vmem>>, vector<1x8x2xf32>
    %54 = vector.shape_cast %53 : vector<1x8x2xf32> to vector<8x2xf32>
    %cst = arith.constant dense<0.000000e+00> : vector<8xf32>
    %55 = vector.multi_reduction <add>, %52, %cst [1] : vector<8x256xf32> to vector<8xf32>
    %56 = vector.shape_cast %55 : vector<8xf32> to vector<8x1xf32>
    %57 = arith.mulf %52, %52 : vector<8x256xf32>
    %cst_8 = arith.constant dense<0.000000e+00> : vector<8xf32>
    %58 = vector.multi_reduction <add>, %57, %cst_8 [1] : vector<8x256xf32> to vector<8xf32>
    %59 = vector.shape_cast %58 : vector<8xf32> to vector<8x1xf32>
    %60 = tpu.concatenate %56, %59 in 1 : vector<8x1xf32>, vector<8x1xf32> -> vector<8x2xf32>
    %61 = arith.addf %54, %60 : vector<8x2xf32>
    %c0_9 = arith.constant 0 : index
    %c0_10 = arith.constant 0 : index
    %c0_11 = arith.constant 0 : index
    %62 = vector.load %arg4[%c0_9, %c0_10, %c0_11] : memref<1x8x2xf32, #tpu.memory_space<vmem>>, vector<1x8x2xf32>
    %63 = vector.shape_cast %62 : vector<1x8x2xf32> to vector<8x2xf32>
    %64 = vector.shape_cast %61 : vector<8x2xf32> to vector<1x8x2xf32>
    tpu.vector_store %arg4[%c0_9, %c0_10, %c0_11], %64 {strides = array<i32>} : memref<1x8x2xf32, #tpu.memory_space<vmem>>, vector<1x8x2xf32>,
    return
  }
  func.func @transform_0(%arg0: i32, %arg1: i32) -> (i32, i32, i32) {
    %c0_i32 = arith.constant 0 : i32
    %c0_i32_0 = arith.constant 0 : i32
    return %arg0, %c0_i32, %arg1 : i32, i32, i32
  }
  func.func @transform_1(%arg0: i32, %arg1: i32) -> (i32, i32) {
    %c0_i32 = arith.constant 0 : i32
    %c0_i32_0 = arith.constant 0 : i32
    %c0_i32_1 = arith.constant 0 : i32
    return %c0_i32, %c0_i32_0 : i32, i32
  }
  func.func @transform_2(%arg0: i32, %arg1: i32) -> (i32, i32, i32) {
    %c0_i32 = arith.constant 0 : i32
    %c0_i32_0 = arith.constant 0 : i32
    %c0_i32_1 = arith.constant 0 : i32
    return %arg0, %c0_i32, %c0_i32_0 : i32, i32, i32
  }
}

module attributes {stable_mosaic.version = 11 : i64} {
  func.func @_bn_relu_kernel(%arg0: i32, %arg1: i32, %arg2: memref<1x4x256xf32, #tpu.memory_space<vmem>>, %arg3: memref<4x1xf32, #tpu.memory_space<vmem>>, %arg4: memref<4x1xf32, #tpu.memory_space<vmem>>, %arg5: memref<1x4x256xf32, #tpu.memory_space<vmem>>) attributes {dimension_semantics = [#tpu.dimension_semantics<parallel>, #tpu.dimension_semantics<parallel>], iteration_bounds = array<i64: 2, 1>, scalar_prefetch = 0 : i64, scratch_operands = 0 : i64, tpu.core_type = #tpu.core_type<tc>, window_params = [{transform_indices = @transform_0, window_bounds = array<i64: 1, 4, 256>}, {pipeline_mode = #tpu.pipeline_mode<synchronous>, transform_indices = @transform_1, window_bounds = array<i64: 4, 1>}, {pipeline_mode = #tpu.pipeline_mode<synchronous>, transform_indices = @transform_2, window_bounds = array<i64: 4, 1>}, {transform_indices = @transform_3, window_bounds = array<i64: 1, 4, 256>}]} {
    %c0 = arith.constant 0 : index
    %c0_0 = arith.constant 0 : index
    %c0_1 = arith.constant 0 : index
    %0 = vector.load %arg2[%c0, %c0_0, %c0_1] : memref<1x4x256xf32, #tpu.memory_space<vmem>>, vector<1x4x256xf32>
    %1 = vector.shape_cast %0 : vector<1x4x256xf32> to vector<4x256xf32>
    %c0_2 = arith.constant 0 : index
    %c0_3 = arith.constant 0 : index
    %2 = vector.load %arg3[%c0_2, %c0_3] : memref<4x1xf32, #tpu.memory_space<vmem>>, vector<4x1xf32>
    %3 = vector.broadcast %2 : vector<4x1xf32> to vector<4x256xf32>
    %4 = arith.mulf %3, %1 : vector<4x256xf32>
    %c0_4 = arith.constant 0 : index
    %c0_5 = arith.constant 0 : index
    %5 = vector.load %arg4[%c0_4, %c0_5] : memref<4x1xf32, #tpu.memory_space<vmem>>, vector<4x1xf32>
    %6 = vector.broadcast %5 : vector<4x1xf32> to vector<4x256xf32>
    %7 = arith.addf %4, %6 : vector<4x256xf32>
    %cst = arith.constant 0.000000e+00 : f32
    %8 = vector.broadcast %cst : f32 to vector<4x256xf32>
    %9 = arith.maximumf %7, %8 : vector<4x256xf32>
    %c0_6 = arith.constant 0 : index
    %c0_7 = arith.constant 0 : index
    %c0_8 = arith.constant 0 : index
    %10 = vector.load %arg5[%c0_6, %c0_7, %c0_8] : memref<1x4x256xf32, #tpu.memory_space<vmem>>, vector<1x4x256xf32>
    %11 = vector.shape_cast %10 : vector<1x4x256xf32> to vector<4x256xf32>
    %12 = vector.shape_cast %9 : vector<4x256xf32> to vector<1x4x256xf32>
    tpu.vector_store %arg5[%c0_6, %c0_7, %c0_8], %12 {strides = array<i32>} : memref<1x4x256xf32, #tpu.memory_space<vmem>>, vector<1x4x256xf32>,
    return
  }
  func.func @transform_0(%arg0: i32, %arg1: i32) -> (i32, i32, i32) {
    %c0_i32 = arith.constant 0 : i32
    %c0_i32_0 = arith.constant 0 : i32
    return %arg0, %c0_i32, %arg1 : i32, i32, i32
  }
  func.func @transform_1(%arg0: i32, %arg1: i32) -> (i32, i32) {
    %c0_i32 = arith.constant 0 : i32
    %c0_i32_0 = arith.constant 0 : i32
    %c0_i32_1 = arith.constant 0 : i32
    return %c0_i32, %c0_i32_0 : i32, i32
  }
  func.func @transform_2(%arg0: i32, %arg1: i32) -> (i32, i32) {
    %c0_i32 = arith.constant 0 : i32
    %c0_i32_0 = arith.constant 0 : i32
    %c0_i32_1 = arith.constant 0 : i32
    return %c0_i32, %c0_i32_0 : i32, i32
  }
  func.func @transform_3(%arg0: i32, %arg1: i32) -> (i32, i32, i32) {
    %c0_i32 = arith.constant 0 : i32
    %c0_i32_0 = arith.constant 0 : i32
    return %arg0, %c0_i32, %arg1 : i32, i32, i32
  }
}

module attributes {stable_mosaic.version = 11 : i64} {
  func.func @_stats_y_kernel(%arg0: i32, %arg1: i32, %arg2: memref<1x8x256xf32, #tpu.memory_space<vmem>>, %arg3: memref<8x8xf32, #tpu.memory_space<vmem>>, %arg4: memref<8x1xf32, #tpu.memory_space<vmem>>, %arg5: memref<4x8xf32, #tpu.memory_space<vmem>>, %arg6: memref<1x4x2xf32, #tpu.memory_space<vmem>>, %arg7: memref<1x4x256xf32, #tpu.memory_space<vmem>>) attributes {dimension_semantics = [#tpu.dimension_semantics<parallel>, #tpu.dimension_semantics<arbitrary>], iteration_bounds = array<i64: 2, 1>, scalar_prefetch = 0 : i64, scratch_operands = 0 : i64, tpu.core_type = #tpu.core_type<tc>, window_params = [{transform_indices = @transform_0, window_bounds = array<i64: 1, 8, 256>}, {pipeline_mode = #tpu.pipeline_mode<synchronous>, transform_indices = @transform_1, window_bounds = array<i64: 8, 8>}, {pipeline_mode = #tpu.pipeline_mode<synchronous>, transform_indices = @transform_2, window_bounds = array<i64: 8, 1>}, {pipeline_mode = #tpu.pipeline_mode<synchronous>, transform_indices = @transform_3, window_bounds = array<i64: 4, 8>}, {transform_indices = @transform_4, window_bounds = array<i64: 1, 4, 2>}, {transform_indices = @transform_5, window_bounds = array<i64: 1, 4, 256>}]} {
    %c0_i32 = arith.constant 0 : i32
    %0 = arith.cmpi eq, %arg1, %c0_i32 : i32
    %1 = arith.extui %0 : i1 to i32
    %c0_i32_0 = arith.constant 0 : i32
    %2 = arith.cmpi ne, %1, %c0_i32_0 : i32
    scf.if %2 {
      %cst_20 = arith.constant 0.000000e+00 : f32
      %121 = vector.broadcast %cst_20 : f32 to vector<4x2xf32>
      %c0_21 = arith.constant 0 : index
      %c0_22 = arith.constant 0 : index
      %c0_23 = arith.constant 0 : index
      %122 = vector.load %arg6[%c0_21, %c0_22, %c0_23] : memref<1x4x2xf32, #tpu.memory_space<vmem>>, vector<1x4x2xf32>
      %123 = vector.shape_cast %122 : vector<1x4x2xf32> to vector<4x2xf32>
      %124 = vector.shape_cast %121 : vector<4x2xf32> to vector<1x4x2xf32>
      tpu.vector_store %arg6[%c0_21, %c0_22, %c0_23], %124 {strides = array<i32>} : memref<1x4x2xf32, #tpu.memory_space<vmem>>, vector<1x4x2xf32>,
    } else {
    }
    %c0 = arith.constant 0 : index
    %c0_1 = arith.constant 0 : index
    %c0_2 = arith.constant 0 : index
    %3 = vector.load %arg2[%c0, %c0_1, %c0_2] : memref<1x8x256xf32, #tpu.memory_space<vmem>>, vector<1x8x256xf32>
    %4 = vector.shape_cast %3 : vector<1x8x256xf32> to vector<8x256xf32>
    %c0_3 = arith.constant 0 : index
    %c0_4 = arith.constant 0 : index
    %5 = vector.load %arg3[%c0_3, %c0_4] : memref<8x8xf32, #tpu.memory_space<vmem>>, vector<8x8xf32>
    %6 = vector.extract_strided_slice %5 {offsets = [0, 0], sizes = [8, 1], strides = [1, 1]} : vector<8x8xf32> to vector<8x1xf32>
    %7 = vector.extract_strided_slice %4 {offsets = [0, 0], sizes = [1, 256], strides = [1, 1]} : vector<8x256xf32> to vector<1x256xf32>
    %8 = vector.broadcast %6 : vector<8x1xf32> to vector<8x256xf32>
    %9 = vector.broadcast %7 : vector<1x256xf32> to vector<8x256xf32>
    %10 = arith.mulf %8, %9 : vector<8x256xf32>
    %11 = vector.extract_strided_slice %5 {offsets = [0, 1], sizes = [8, 1], strides = [1, 1]} : vector<8x8xf32> to vector<8x1xf32>
    %12 = vector.extract_strided_slice %4 {offsets = [1, 0], sizes = [1, 256], strides = [1, 1]} : vector<8x256xf32> to vector<1x256xf32>
    %13 = vector.broadcast %11 : vector<8x1xf32> to vector<8x256xf32>
    %14 = vector.broadcast %12 : vector<1x256xf32> to vector<8x256xf32>
    %15 = arith.mulf %13, %14 : vector<8x256xf32>
    %16 = arith.addf %10, %15 : vector<8x256xf32>
    %17 = vector.extract_strided_slice %5 {offsets = [0, 2], sizes = [8, 1], strides = [1, 1]} : vector<8x8xf32> to vector<8x1xf32>
    %18 = vector.extract_strided_slice %4 {offsets = [2, 0], sizes = [1, 256], strides = [1, 1]} : vector<8x256xf32> to vector<1x256xf32>
    %19 = vector.broadcast %17 : vector<8x1xf32> to vector<8x256xf32>
    %20 = vector.broadcast %18 : vector<1x256xf32> to vector<8x256xf32>
    %21 = arith.mulf %19, %20 : vector<8x256xf32>
    %22 = arith.addf %16, %21 : vector<8x256xf32>
    %23 = vector.extract_strided_slice %5 {offsets = [0, 3], sizes = [8, 1], strides = [1, 1]} : vector<8x8xf32> to vector<8x1xf32>
    %24 = vector.extract_strided_slice %4 {offsets = [3, 0], sizes = [1, 256], strides = [1, 1]} : vector<8x256xf32> to vector<1x256xf32>
    %25 = vector.broadcast %23 : vector<8x1xf32> to vector<8x256xf32>
    %26 = vector.broadcast %24 : vector<1x256xf32> to vector<8x256xf32>
    %27 = arith.mulf %25, %26 : vector<8x256xf32>
    %28 = arith.addf %22, %27 : vector<8x256xf32>
    %29 = vector.extract_strided_slice %5 {offsets = [0, 4], sizes = [8, 1], strides = [1, 1]} : vector<8x8xf32> to vector<8x1xf32>
    %30 = vector.extract_strided_slice %4 {offsets = [4, 0], sizes = [1, 256], strides = [1, 1]} : vector<8x256xf32> to vector<1x256xf32>
    %31 = vector.broadcast %29 : vector<8x1xf32> to vector<8x256xf32>
    %32 = vector.broadcast %30 : vector<1x256xf32> to vector<8x256xf32>
    %33 = arith.mulf %31, %32 : vector<8x256xf32>
    %34 = arith.addf %28, %33 : vector<8x256xf32>
    %35 = vector.extract_strided_slice %5 {offsets = [0, 5], sizes = [8, 1], strides = [1, 1]} : vector<8x8xf32> to vector<8x1xf32>
    %36 = vector.extract_strided_slice %4 {offsets = [5, 0], sizes = [1, 256], strides = [1, 1]} : vector<8x256xf32> to vector<1x256xf32>
    %37 = vector.broadcast %35 : vector<8x1xf32> to vector<8x256xf32>
    %38 = vector.broadcast %36 : vector<1x256xf32> to vector<8x256xf32>
    %39 = arith.mulf %37, %38 : vector<8x256xf32>
    %40 = arith.addf %34, %39 : vector<8x256xf32>
    %41 = vector.extract_strided_slice %5 {offsets = [0, 6], sizes = [8, 1], strides = [1, 1]} : vector<8x8xf32> to vector<8x1xf32>
    %42 = vector.extract_strided_slice %4 {offsets = [6, 0], sizes = [1, 256], strides = [1, 1]} : vector<8x256xf32> to vector<1x256xf32>
    %43 = vector.broadcast %41 : vector<8x1xf32> to vector<8x256xf32>
    %44 = vector.broadcast %42 : vector<1x256xf32> to vector<8x256xf32>
    %45 = arith.mulf %43, %44 : vector<8x256xf32>
    %46 = arith.addf %40, %45 : vector<8x256xf32>
    %47 = vector.extract_strided_slice %5 {offsets = [0, 7], sizes = [8, 1], strides = [1, 1]} : vector<8x8xf32> to vector<8x1xf32>
    %48 = vector.extract_strided_slice %4 {offsets = [7, 0], sizes = [1, 256], strides = [1, 1]} : vector<8x256xf32> to vector<1x256xf32>
    %49 = vector.broadcast %47 : vector<8x1xf32> to vector<8x256xf32>
    %50 = vector.broadcast %48 : vector<1x256xf32> to vector<8x256xf32>
    %51 = arith.mulf %49, %50 : vector<8x256xf32>
    %52 = arith.addf %46, %51 : vector<8x256xf32>
    %c0_5 = arith.constant 0 : index
    %c0_6 = arith.constant 0 : index
    %53 = vector.load %arg4[%c0_5, %c0_6] : memref<8x1xf32, #tpu.memory_space<vmem>>, vector<8x1xf32>
    %54 = vector.broadcast %53 : vector<8x1xf32> to vector<8x256xf32>
    %55 = arith.addf %52, %54 : vector<8x256xf32>
    %cst = arith.constant 0.000000e+00 : f32
    %56 = vector.broadcast %cst : f32 to vector<8x256xf32>
    %57 = arith.maximumf %55, %56 : vector<8x256xf32>
    %c0_7 = arith.constant 0 : index
    %c0_8 = arith.constant 0 : index
    %58 = vector.load %arg5[%c0_7, %c0_8] : memref<4x8xf32, #tpu.memory_space<vmem>>, vector<4x8xf32>
    %59 = vector.extract_strided_slice %58 {offsets = [0, 0], sizes = [4, 1], strides = [1, 1]} : vector<4x8xf32> to vector<4x1xf32>
    %60 = vector.extract_strided_slice %57 {offsets = [0, 0], sizes = [1, 256], strides = [1, 1]} : vector<8x256xf32> to vector<1x256xf32>
    %61 = vector.broadcast %59 : vector<4x1xf32> to vector<4x256xf32>
    %62 = vector.broadcast %60 : vector<1x256xf32> to vector<4x256xf32>
    %63 = arith.mulf %61, %62 : vector<4x256xf32>
    %64 = vector.extract_strided_slice %58 {offsets = [0, 1], sizes = [4, 1], strides = [1, 1]} : vector<4x8xf32> to vector<4x1xf32>
    %65 = vector.extract_strided_slice %57 {offsets = [1, 0], sizes = [1, 256], strides = [1, 1]} : vector<8x256xf32> to vector<1x256xf32>
    %66 = vector.broadcast %64 : vector<4x1xf32> to vector<4x256xf32>
    %67 = vector.broadcast %65 : vector<1x256xf32> to vector<4x256xf32>
    %68 = arith.mulf %66, %67 : vector<4x256xf32>
    %69 = arith.addf %63, %68 : vector<4x256xf32>
    %70 = vector.extract_strided_slice %58 {offsets = [0, 2], sizes = [4, 1], strides = [1, 1]} : vector<4x8xf32> to vector<4x1xf32>
    %71 = vector.extract_strided_slice %57 {offsets = [2, 0], sizes = [1, 256], strides = [1, 1]} : vector<8x256xf32> to vector<1x256xf32>
    %72 = vector.broadcast %70 : vector<4x1xf32> to vector<4x256xf32>
    %73 = vector.broadcast %71 : vector<1x256xf32> to vector<4x256xf32>
    %74 = arith.mulf %72, %73 : vector<4x256xf32>
    %75 = arith.addf %69, %74 : vector<4x256xf32>
    %76 = vector.extract_strided_slice %58 {offsets = [0, 3], sizes = [4, 1], strides = [1, 1]} : vector<4x8xf32> to vector<4x1xf32>
    %77 = vector.extract_strided_slice %57 {offsets = [3, 0], sizes = [1, 256], strides = [1, 1]} : vector<8x256xf32> to vector<1x256xf32>
    %78 = vector.broadcast %76 : vector<4x1xf32> to vector<4x256xf32>
    %79 = vector.broadcast %77 : vector<1x256xf32> to vector<4x256xf32>
    %80 = arith.mulf %78, %79 : vector<4x256xf32>
    %81 = arith.addf %75, %80 : vector<4x256xf32>
    %82 = vector.extract_strided_slice %58 {offsets = [0, 4], sizes = [4, 1], strides = [1, 1]} : vector<4x8xf32> to vector<4x1xf32>
    %83 = vector.extract_strided_slice %57 {offsets = [4, 0], sizes = [1, 256], strides = [1, 1]} : vector<8x256xf32> to vector<1x256xf32>
    %84 = vector.broadcast %82 : vector<4x1xf32> to vector<4x256xf32>
    %85 = vector.broadcast %83 : vector<1x256xf32> to vector<4x256xf32>
    %86 = arith.mulf %84, %85 : vector<4x256xf32>
    %87 = arith.addf %81, %86 : vector<4x256xf32>
    %88 = vector.extract_strided_slice %58 {offsets = [0, 5], sizes = [4, 1], strides = [1, 1]} : vector<4x8xf32> to vector<4x1xf32>
    %89 = vector.extract_strided_slice %57 {offsets = [5, 0], sizes = [1, 256], strides = [1, 1]} : vector<8x256xf32> to vector<1x256xf32>
    %90 = vector.broadcast %88 : vector<4x1xf32> to vector<4x256xf32>
    %91 = vector.broadcast %89 : vector<1x256xf32> to vector<4x256xf32>
    %92 = arith.mulf %90, %91 : vector<4x256xf32>
    %93 = arith.addf %87, %92 : vector<4x256xf32>
    %94 = vector.extract_strided_slice %58 {offsets = [0, 6], sizes = [4, 1], strides = [1, 1]} : vector<4x8xf32> to vector<4x1xf32>
    %95 = vector.extract_strided_slice %57 {offsets = [6, 0], sizes = [1, 256], strides = [1, 1]} : vector<8x256xf32> to vector<1x256xf32>
    %96 = vector.broadcast %94 : vector<4x1xf32> to vector<4x256xf32>
    %97 = vector.broadcast %95 : vector<1x256xf32> to vector<4x256xf32>
    %98 = arith.mulf %96, %97 : vector<4x256xf32>
    %99 = arith.addf %93, %98 : vector<4x256xf32>
    %100 = vector.extract_strided_slice %58 {offsets = [0, 7], sizes = [4, 1], strides = [1, 1]} : vector<4x8xf32> to vector<4x1xf32>
    %101 = vector.extract_strided_slice %57 {offsets = [7, 0], sizes = [1, 256], strides = [1, 1]} : vector<8x256xf32> to vector<1x256xf32>
    %102 = vector.broadcast %100 : vector<4x1xf32> to vector<4x256xf32>
    %103 = vector.broadcast %101 : vector<1x256xf32> to vector<4x256xf32>
    %104 = arith.mulf %102, %103 : vector<4x256xf32>
    %105 = arith.addf %99, %104 : vector<4x256xf32>
    %c0_9 = arith.constant 0 : index
    %c0_10 = arith.constant 0 : index
    %c0_11 = arith.constant 0 : index
    %106 = vector.load %arg7[%c0_9, %c0_10, %c0_11] : memref<1x4x256xf32, #tpu.memory_space<vmem>>, vector<1x4x256xf32>
    %107 = vector.shape_cast %106 : vector<1x4x256xf32> to vector<4x256xf32>
    %108 = vector.shape_cast %105 : vector<4x256xf32> to vector<1x4x256xf32>
    tpu.vector_store %arg7[%c0_9, %c0_10, %c0_11], %108 {strides = array<i32>} : memref<1x4x256xf32, #tpu.memory_space<vmem>>, vector<1x4x256xf32>,
    %c0_12 = arith.constant 0 : index
    %c0_13 = arith.constant 0 : index
    %c0_14 = arith.constant 0 : index
    %109 = vector.load %arg6[%c0_12, %c0_13, %c0_14] : memref<1x4x2xf32, #tpu.memory_space<vmem>>, vector<1x4x2xf32>
    %110 = vector.shape_cast %109 : vector<1x4x2xf32> to vector<4x2xf32>
    %cst_15 = arith.constant dense<0.000000e+00> : vector<4xf32>
    %111 = vector.multi_reduction <add>, %105, %cst_15 [1] : vector<4x256xf32> to vector<4xf32>
    %112 = vector.shape_cast %111 : vector<4xf32> to vector<4x1xf32>
    %113 = arith.mulf %105, %105 : vector<4x256xf32>
    %cst_16 = arith.constant dense<0.000000e+00> : vector<4xf32>
    %114 = vector.multi_reduction <add>, %113, %cst_16 [1] : vector<4x256xf32> to vector<4xf32>
    %115 = vector.shape_cast %114 : vector<4xf32> to vector<4x1xf32>
    %116 = tpu.concatenate %112, %115 in 1 : vector<4x1xf32>, vector<4x1xf32> -> vector<4x2xf32>
    %117 = arith.addf %110, %116 : vector<4x2xf32>
    %c0_17 = arith.constant 0 : index
    %c0_18 = arith.constant 0 : index
    %c0_19 = arith.constant 0 : index
    %118 = vector.load %arg6[%c0_17, %c0_18, %c0_19] : memref<1x4x2xf32, #tpu.memory_space<vmem>>, vector<1x4x2xf32>
    %119 = vector.shape_cast %118 : vector<1x4x2xf32> to vector<4x2xf32>
    %120 = vector.shape_cast %117 : vector<4x2xf32> to vector<1x4x2xf32>
    tpu.vector_store %arg6[%c0_17, %c0_18, %c0_19], %120 {strides = array<i32>} : memref<1x4x2xf32, #tpu.memory_space<vmem>>, vector<1x4x2xf32>,
    return
  }
  func.func @transform_0(%arg0: i32, %arg1: i32) -> (i32, i32, i32) {
    %c0_i32 = arith.constant 0 : i32
    %c0_i32_0 = arith.constant 0 : i32
    return %arg0, %c0_i32, %arg1 : i32, i32, i32
  }
  func.func @transform_1(%arg0: i32, %arg1: i32) -> (i32, i32) {
    %c0_i32 = arith.constant 0 : i32
    %c0_i32_0 = arith.constant 0 : i32
    %c0_i32_1 = arith.constant 0 : i32
    return %c0_i32, %c0_i32_0 : i32, i32
  }
  func.func @transform_2(%arg0: i32, %arg1: i32) -> (i32, i32) {
    %c0_i32 = arith.constant 0 : i32
    %c0_i32_0 = arith.constant 0 : i32
    %c0_i32_1 = arith.constant 0 : i32
    return %c0_i32, %c0_i32_0 : i32, i32
  }
  func.func @transform_3(%arg0: i32, %arg1: i32) -> (i32, i32) {
    %c0_i32 = arith.constant 0 : i32
    %c0_i32_0 = arith.constant 0 : i32
    %c0_i32_1 = arith.constant 0 : i32
    return %c0_i32, %c0_i32_0 : i32, i32
  }
  func.func @transform_4(%arg0: i32, %arg1: i32) -> (i32, i32, i32) {
    %c0_i32 = arith.constant 0 : i32
    %c0_i32_0 = arith.constant 0 : i32
    %c0_i32_1 = arith.constant 0 : i32
    return %arg0, %c0_i32, %c0_i32_0 : i32, i32, i32
  }
  func.func @transform_5(%arg0: i32, %arg1: i32) -> (i32, i32, i32) {
    %c0_i32 = arith.constant 0 : i32
    %c0_i32_0 = arith.constant 0 : i32
    return %arg0, %c0_i32, %arg1 : i32, i32, i32
  }
}

</mosaic_0001>

<llo_original>
// kernel: pixel_map_estimator_bn.3
$region0: #{pixel_map_estimator_bn.3}
  #allocation0 [shape = 'u32[]', space=smem, size = 0x4, offset = 0x4, fixed_abs, tag = 'smem constant byte address 0x4 - core index']
  #allocation1 [shape = 'u32[72,128]{1,0:T(1,128)}', space=vmem, size = 0x9000, scoped, tag = 'internal scratch']
  %s0 = inlined_call_operand.vmem [shape: f32[2,8,256], index: 0, kind: input, shape index: {}]
  %s1 = inlined_call_operand.vmem [shape: f32[8,8], index: 1, kind: input, shape index: {}]
  %s2 = inlined_call_operand.vmem [shape: f32[2,8,2], index: 2, kind: output, shape index: {}]
  %s3 = sld [smem:[#allocation0]]
  $region45: #{pixel_map_estimator_bn.3} parent=0
    _
  %s5 = ssub.s32 1, %s3
  %s6 = scalar_select 0, %s5, %s3
  loop: start=0, step=1, limit=4
  $region2: #{pixel_map_estimator_bn.3} parent=0 // loop_pre_header
    _
  $region3: #{pixel_map_estimator_bn.3} parent=0 // loop_header
    %s8 = sphi 0, %s12
    %p9 = scmp.ge.s32.totalorder %s8, 4
    %s15 = sphi 0, %s27
    %s16 = sphi 0, %s23
    %s17 = sphi 0, %s15
    %s18 = sphi 0, %s16
    %s19 = sphi 0, %s17
    %s20 = sphi 0, %s18
    %s32 = sphi 0, %s34
    %s35 = sphi 0, %s32
    %s36 = sphi 0, %s35
    %s52 = sphi 0, %s36
    %s56 = sphi 0, %s56
    %s58 = sphi 0, %s56
    %s59 = sphi 0, %s58
    %s73 = sphi 0, %s59
    %s79 = sphi 0, %s81
    %s82 = sphi 0, %s79
    %s83 = sphi 0, %s82
    %s99 = sphi 0, %s83
  $region4: #{pixel_map_estimator_bn.3} parent=0 // loop_header_branch
    %11 = sbr.rel (%p9) target = $region8
  $region5: #{pixel_map_estimator_bn.3} parent=0 // loop_body
    %s13 = ssub.s32 %s8, 1
    %s14 = ssub.s32 %s8, 2
    %s21 = sadd.s32 1, %s16
    %p22 = scmp.ge.s32.totalorder %s21, 1
    %s23 = scalar_select %p22, 0, %s21
    %s24 = sadd.s32 1, %s15
    %s25 = scalar_select %p22, %s24, %s15
    %p26 = scmp.ge.s32.totalorder %s25, 2
    %s27 = scalar_select %p26, 0, %s25
    %s28 = ssub.s32 %s15, %s27
    %s29 = ssub.s32 %s16, %s23
    %s30 = sor.u32 %s28, %s29
    %p31 = scmp.eq.s32.totalorder %s30, 0
    %s33 = sadd.s32 %s32, 1
    %s34 = scalar_select %p31, %s32, %s33
    %p37 = pneg %p31
    %p38 = scmp.eq.s32.totalorder %s8, 1
    %p39 = por %p37, %p38
    %p40 = scmp.ne.s32.totalorder %s32, %s35
    %p41 = scmp.eq.s32.totalorder %s8, 0
    %p42 = por %p40, %p41
    %p43 = scmp.ne.s32.totalorder %s32, %s35
    %p44 = scmp.eq.s32.totalorder %s13, 1
    %p45 = por %p43, %p44
    %p46 = scmp.ne.s32.totalorder %s35, %s36
    %p47 = scmp.eq.s32.totalorder %s13, 0
    %p48 = por %p46, %p47
    %p49 = scmp.ne.s32.totalorder %s35, %s36
    %p50 = scmp.eq.s32.totalorder %s14, 1
    %p51 = por %p49, %p50
    %p53 = scmp.ne.s32.totalorder %s36, %s52
    %p54 = scmp.eq.s32.totalorder %s14, 0
    %p55 = por %p53, %p54
    %s57 = sadd.s32 %s56, 1
    %p60 = scmp.eq.s32.totalorder %s8, 1
    %p61 = scmp.ne.s32.totalorder %s56, %s58
    %p62 = scmp.eq.s32.totalorder %s8, 0
    %p63 = por %p61, %p62
    %p64 = scmp.ne.s32.totalorder %s56, %s58
    %p65 = scmp.eq.s32.totalorder %s13, 1
    %p66 = por %p64, %p65
    %p67 = scmp.ne.s32.totalorder %s58, %s59
    %p68 = scmp.eq.s32.totalorder %s13, 0
    %p69 = por %p67, %p68
    %p70 = scmp.ne.s32.totalorder %s58, %s59
    %p71 = scmp.eq.s32.totalorder %s14, 1
    %p72 = por %p70, %p71
    %p74 = scmp.ne.s32.totalorder %s59, %s73
    %p75 = scmp.eq.s32.totalorder %s14, 0
    %p76 = por %p74, %p75
    %s77 = ssub.s32 %s15, %s27
    %p78 = scmp.eq.s32.totalorder %s77, 0
    %s80 = sadd.s32 %s79, 1
    %s81 = scalar_select %p78, %s79, %s80
    %p84 = pneg %p78
    %p85 = scmp.eq.s32.totalorder %s8, 1
    %p86 = por %p84, %p85
    %p87 = scmp.ne.s32.totalorder %s79, %s82
    %p88 = scmp.eq.s32.totalorder %s8, 0
    %p89 = por %p87, %p88
    %p90 = scmp.ne.s32.totalorder %s79, %s82
    %p91 = scmp.eq.s32.totalorder %s13, 1
    %p92 = por %p90, %p91
    %p93 = scmp.ne.s32.totalorder %s82, %s83
    %p94 = scmp.eq.s32.totalorder %s13, 0
    %p95 = por %p93, %p94
    %p96 = scmp.ne.s32.totalorder %s82, %s83
    %p97 = scmp.eq.s32.totalorder %s14, 1
    %p98 = por %p96, %p97
    %p100 = scmp.ne.s32.totalorder %s83, %s99
    %p101 = scmp.eq.s32.totalorder %s14, 0
    %p102 = por %p100, %p101
    %p103 = scmp.le.s32.totalorder 1, %s8
    %p104 = scmp.lt.s32.totalorder %s8, 3
    %p105 = pnand %p103, %p104
    %p106 = pneg %p105
    // Predicated region
    $region9: #{pixel_map_estimator_bn.3} parent=5 // pred_check
      _
    $region10: #{pixel_map_estimator_bn.3} parent=5 // pred_check_branch
      %108 = sbr.rel (%p105) target = $region12
    $region11: #{pixel_map_estimator_bn.3} parent=5 // pred_region
      %s109 = ssub.s32 %s8, 1
      // Predicated region
      $region13: #{pixel_map_estimator_bn.3} parent=11 // pred_check
        %p110 = pneg %p69
      $region14: #{pixel_map_estimator_bn.3} parent=11 // pred_check_branch
        %112 = sbr.rel (%p110) target = $region16
      $region15: #{pixel_map_estimator_bn.3} parent=11 // pred_region
        _
      $region16: #{pixel_map_estimator_bn.3} parent=11 // pred_fallthru
        _
    $region12: #{pixel_map_estimator_bn.3} parent=5 // pred_fallthru
      _
    %p113 = scmp.lt.s32.totalorder %s8, 2
    // Predicated region
    $region17: #{pixel_map_estimator_bn.3} parent=5 // pred_check
      %p114 = pneg %p113
    $region18: #{pixel_map_estimator_bn.3} parent=5 // pred_check_branch
      %116 = sbr.rel (%p114) target = $region20
    $region19: #{pixel_map_estimator_bn.3} parent=5 // pred_region
      // Predicated region
      $region21: #{pixel_map_estimator_bn.3} parent=19 // pred_check
        %p117 = pneg %p42
      $region22: #{pixel_map_estimator_bn.3} parent=19 // pred_check_branch
        %119 = sbr.rel (%p117) target = $region24
      $region23: #{pixel_map_estimator_bn.3} parent=19 // pred_region
        %s120 = smul.u32 2, %s16
        %p121 = scmp.lt.s32.totalorder %s15, 1
        %s122 = scalar_select %p121, %s15, 1
        %p123 = scmp.lt.s32.totalorder %s120, 1
        %s124 = scalar_select %p123, %s120, 1
        %s125 = smul.addr %s122, 2
        %s126 = sadd.s32 %s124, %s125
        %s127 = smul.addr %s126, 8
        %s128 = scalar_lea.vmem %s0, %s127
        %s129 = smul.u32 2, %s16
      $region24: #{pixel_map_estimator_bn.3} parent=19 // pred_fallthru
        _
    $region20: #{pixel_map_estimator_bn.3} parent=5 // pred_fallthru
      _
    %p130 = scmp.le.s32.totalorder 1, %s8
    %p131 = scmp.lt.s32.totalorder %s8, 3
    %p132 = pnand %p130, %p131
    %p133 = pneg %p132
    // Predicated region
    $region25: #{pixel_map_estimator_bn.3} parent=5 // pred_check
      _
    $region26: #{pixel_map_estimator_bn.3} parent=5 // pred_check_branch
      %135 = sbr.rel (%p132) target = $region28
    $region27: #{pixel_map_estimator_bn.3} parent=5 // pred_region
      %s136 = ssub.s32 %s8, 1
      %s137 = smul.u32 2, %s18
      %p138 = scmp.lt.s32.totalorder %s17, 1
      %s139 = scalar_select %p138, %s17, 1
      %p140 = scmp.lt.s32.totalorder %s137, 1
      %s141 = scalar_select %p140, %s137, 1
      %s142 = smul.addr %s139, 2
      %s143 = sadd.s32 %s141, %s142
      %s144 = smul.addr %s143, 8
      %s145 = scalar_lea.vmem %s0, %s144
      %p146 = pneg %p48
      %p147 = pneg %p45
      %p148 = pneg %p69
      %p149 = pneg %p66
      %p150 = pneg %p95
      %p151 = pneg %p92
      %p152 = scmp.lt.s32.totalorder %s17, 1
      %s153 = scalar_select %p152, %s17, 1
      %s154 = smul.addr %s153, 8
      %s155 = scalar_lea.vmem %s2, %s154
      %s156 = smul.u32 2, %s18
      %p157 = scmp.lt.s32.totalorder %s17, 1
      %s158 = scalar_select %p157, %s17, 1
      %p159 = scmp.lt.s32.totalorder %s156, 1
      %s160 = scalar_select %p159, %s156, 1
      %s161 = smul.addr %s158, 2
      %s162 = sadd.s32 %s160, %s161
      %s163 = smul.addr %s162, 8
      %s164 = scalar_lea.vmem %s0, %s163
      %s165 = smul.u32 2, %s18
      %p166 = scmp.lt.s32.totalorder %s17, 1
      %s167 = scalar_select %p166, %s17, 1
      %s168 = smul.addr %s167, 8
      %s169 = scalar_lea.vmem %s2, %s168
      %p170 = scmp.eq.s32.totalorder %s18, 0
      // Predicated region
      $region29: #{pixel_map_estimator_bn.3} parent=27 // pred_check
        %p171 = pneg %p170
      $region30: #{pixel_map_estimator_bn.3} parent=27 // pred_check_branch
        %173 = sbr.rel (%p171) target = $region32
      $region31: #{pixel_map_estimator_bn.3} parent=27 // pred_region
        %vm174 = vcmask 15360
        %175 = vst.msk [vmem:[%s169] sm:$0xff] %vm174, 0.0
      $region32: #{pixel_map_estimator_bn.3} parent=27 // pred_fallthru
        _
      %v176 = vld [vmem:[%s164] sm:$0xff]
      %v177 = vld [vmem:[%s164 + $0x8] sm:$0xff]
      %v178 = vld [vmem:[%s1] sm:$0xff]
      %180 = vset.pattern.permute.xlu0 0
      %181 = vperm.xlu0 %180, %v178
      %v182 = vpop.permute.xlu0 %181
      %v184 = vperm.slane %v176, 0
      %v185 = vperm.slane %v177, 0
      %v186 = vmul.f32 %v182, %v184
      %v187 = vmul.f32 %v182, %v185
      %188 = vset.pattern.permute.xlu0 1
      %189 = vperm.xlu0 %188, %v178
      %v190 = vpop.permute.xlu0 %189
      %v192 = vperm.slane %v176, 1
      %v193 = vperm.slane %v177, 1
      %v194 = vmul.f32 %v190, %v192
      %v195 = vmul.f32 %v190, %v193
      %v196 = vadd.f32 %v186, %v194
      %v197 = vadd.f32 %v187, %v195
      %198 = vset.pattern.permute.xlu0 2
      %199 = vperm.xlu0 %198, %v178
      %v200 = vpop.permute.xlu0 %199
      %v202 = vperm.slane %v176, 2
      %v203 = vperm.slane %v177, 2
      %v204 = vmul.f32 %v200, %v202
      %v205 = vmul.f32 %v200, %v203
      %v206 = vadd.f32 %v196, %v204
      %v207 = vadd.f32 %v197, %v205
      %208 = vset.pattern.permute.xlu0 3
      %209 = vperm.xlu0 %208, %v178
      %v210 = vpop.permute.xlu0 %209
      %v212 = vperm.slane %v176, 3
      %v213 = vperm.slane %v177, 3
      %v214 = vmul.f32 %v210, %v212
      %v215 = vmul.f32 %v210, %v213
      %v216 = vadd.f32 %v206, %v214
      %v217 = vadd.f32 %v207, %v215
      %218 = vset.pattern.permute.xlu0 4
      %219 = vperm.xlu0 %218, %v178
      %v220 = vpop.permute.xlu0 %219
      %v222 = vperm.slane %v176, 4
      %v223 = vperm.slane %v177, 4
      %v224 = vmul.f32 %v220, %v222
      %v225 = vmul.f32 %v220, %v223
      %v226 = vadd.f32 %v216, %v224
      %v227 = vadd.f32 %v217, %v225
      %228 = vset.pattern.permute.xlu0 5
      %229 = vperm.xlu0 %228, %v178
      %v230 = vpop.permute.xlu0 %229
      %v232 = vperm.slane %v176, 5
      %v233 = vperm.slane %v177, 5
      %v234 = vmul.f32 %v230, %v232
      %v235 = vmul.f32 %v230, %v233
      %v236 = vadd.f32 %v226, %v234
      %v237 = vadd.f32 %v227, %v235
      %238 = vset.pattern.permute.xlu0 6
      %239 = vperm.xlu0 %238, %v178
      %v240 = vpop.permute.xlu0 %239
      %v242 = vperm.slane %v176, 6
      %v243 = vperm.slane %v177, 6
      %v244 = vmul.f32 %v240, %v242
      %v245 = vmul.f32 %v240, %v243
      %v246 = vadd.f32 %v236, %v244
      %v247 = vadd.f32 %v237, %v245
      %248 = vset.pattern.permute.xlu0 7
      %249 = vperm.xlu0 %248, %v178
      %v250 = vpop.permute.xlu0 %249
      %v252 = vperm.slane %v176, 7
      %v253 = vperm.slane %v177, 7
      %v254 = vmul.f32 %v250, %v252
      %v255 = vmul.f32 %v250, %v253
      %v256 = vadd.f32 %v246, %v254
      %v257 = vadd.f32 %v247, %v255
      %v258 = vld [vmem:[%s169] sm:$0xff]
      %v259 = vadd.f32 %v256, %v257
      %260 = vadd.xlane.f32.xlu0 %v259
      %v261 = vpop.xlane.xlu0 %260
      %v262 = vmul.f32 %v256, %v256
      %v263 = vmul.f32 %v257, %v257
      %v264 = vadd.f32 %v262, %v263
      %265 = vadd.xlane.f32.xlu0 %v264
      %v266 = vpop.xlane.xlu0 %265
      %vm267 = vcmask 7168
      %v268 = vsel %vm267, %v261, %v266
      %v269 = vadd.f32 %v258, %v268
      %vm270 = vcmask 15360
      %271 = vst.msk [vmem:[%s169] sm:$0xff] %vm270, %v269
      %p272 = scmp.lt.s32.totalorder %s17, 1
      %s273 = scalar_select %p272, %s17, 1
      %s274 = smul.addr %s273, 8
      %s275 = scalar_lea.vmem %s2, %s274
      // Predicated region
      $region33: #{pixel_map_estimator_bn.3} parent=27 // pred_check
        %p276 = pneg %p92
      $region34: #{pixel_map_estimator_bn.3} parent=27 // pred_check_branch
        %278 = sbr.rel (%p276) target = $region36
      $region35: #{pixel_map_estimator_bn.3} parent=27 // pred_region
        _
      $region36: #{pixel_map_estimator_bn.3} parent=27 // pred_fallthru
        _
    $region28: #{pixel_map_estimator_bn.3} parent=5 // pred_fallthru
      _
    %p279 = scmp.le.s32.totalorder 2, %s8
    // Predicated region
    $region37: #{pixel_map_estimator_bn.3} parent=5 // pred_check
      %p280 = pneg %p279
    $region38: #{pixel_map_estimator_bn.3} parent=5 // pred_check_branch
      %282 = sbr.rel (%p280) target = $region40
    $region39: #{pixel_map_estimator_bn.3} parent=5 // pred_region
      %s283 = ssub.s32 %s8, 2
      // Predicated region
      $region41: #{pixel_map_estimator_bn.3} parent=39 // pred_check
        %p284 = pneg %p98
      $region42: #{pixel_map_estimator_bn.3} parent=39 // pred_check_branch
        %286 = sbr.rel (%p284) target = $region44
      $region43: #{pixel_map_estimator_bn.3} parent=39 // pred_region
        %p287 = scmp.lt.s32.totalorder %s19, 1
        %s288 = scalar_select %p287, %s19, 1
        %s289 = smul.addr %s288, 8
        %s290 = scalar_lea.vmem %s2, %s289
      $region44: #{pixel_map_estimator_bn.3} parent=39 // pred_fallthru
        _
    $region40: #{pixel_map_estimator_bn.3} parent=5 // pred_fallthru
      _
  $region6: #{pixel_map_estimator_bn.3} parent=0 // loop_footer
    %s12 = sadd.s32 1, %s8
  $region7: #{pixel_map_estimator_bn.3} parent=0 // loop_footer_branch
    %7 = sbr.rel target = $region3
  $region8: #{pixel_map_estimator_bn.3} parent=0 // loop_exit
    _

// kernel: pixel_map_estimator_bn.5
$region0: #{pixel_map_estimator_bn.5}
  #allocation0 [shape = 'u32[]', space=smem, size = 0x4, offset = 0x4, fixed_abs, tag = 'smem constant byte address 0x4 - core index']
  #allocation1 [shape = 'u32[72,128]{1,0:T(1,128)}', space=vmem, size = 0x9000, scoped, tag = 'internal scratch']
  %s0 = inlined_call_operand.vmem [shape: f32[2,4,256], index: 0, kind: input, shape index: {}, may-alias: {0,3}]
  %s1 = inlined_call_operand.vmem [shape: f32[4,1], index: 1, kind: input, shape index: {}]
  %s2 = inlined_call_operand.vmem [shape: f32[4,1], index: 2, kind: input, shape index: {}]
  %s3 = inlined_call_operand.vmem [shape: f32[2,4,256], index: 3, kind: output, shape index: {}, may-alias: {0,3}]
  %s4 = sld [smem:[#allocation0]]
  $region45: #{pixel_map_estimator_bn.5} parent=0
    _
  %s6 = ssub.s32 1, %s4
  %s7 = scalar_select 0, %s6, %s4
  loop: start=0, step=1, limit=4
  $region2: #{pixel_map_estimator_bn.5} parent=0 // loop_pre_header
    _
  $region3: #{pixel_map_estimator_bn.5} parent=0 // loop_header
    %s9 = sphi 0, %s13
    %p10 = scmp.ge.s32.totalorder %s9, 4
    %s16 = sphi 0, %s28
    %s17 = sphi 0, %s24
    %s18 = sphi 0, %s16
    %s19 = sphi 0, %s17
    %s20 = sphi 0, %s18
    %s21 = sphi 0, %s19
    %s33 = sphi 0, %s35
    %s36 = sphi 0, %s33
    %s37 = sphi 0, %s36
    %s53 = sphi 0, %s37
    %s57 = sphi 0, %s57
    %s59 = sphi 0, %s57
    %s60 = sphi 0, %s59
    %s74 = sphi 0, %s60
    %s78 = sphi 0, %s78
    %s80 = sphi 0, %s78
    %s81 = sphi 0, %s80
    %s95 = sphi 0, %s81
    %s103 = sphi 0, %s105
    %s106 = sphi 0, %s103
    %s107 = sphi 0, %s106
    %s123 = sphi 0, %s107
  $region4: #{pixel_map_estimator_bn.5} parent=0 // loop_header_branch
    %12 = sbr.rel (%p10) target = $region8
  $region5: #{pixel_map_estimator_bn.5} parent=0 // loop_body
    %s14 = ssub.s32 %s9, 1
    %s15 = ssub.s32 %s9, 2
    %s22 = sadd.s32 1, %s17
    %p23 = scmp.ge.s32.totalorder %s22, 1
    %s24 = scalar_select %p23, 0, %s22
    %s25 = sadd.s32 1, %s16
    %s26 = scalar_select %p23, %s25, %s16
    %p27 = scmp.ge.s32.totalorder %s26, 2
    %s28 = scalar_select %p27, 0, %s26
    %s29 = ssub.s32 %s16, %s28
    %s30 = ssub.s32 %s17, %s24
    %s31 = sor.u32 %s29, %s30
    %p32 = scmp.eq.s32.totalorder %s31, 0
    %s34 = sadd.s32 %s33, 1
    %s35 = scalar_select %p32, %s33, %s34
    %p38 = pneg %p32
    %p39 = scmp.eq.s32.totalorder %s9, 1
    %p40 = por %p38, %p39
    %p41 = scmp.ne.s32.totalorder %s33, %s36
    %p42 = scmp.eq.s32.totalorder %s9, 0
    %p43 = por %p41, %p42
    %p44 = scmp.ne.s32.totalorder %s33, %s36
    %p45 = scmp.eq.s32.totalorder %s14, 1
    %p46 = por %p44, %p45
    %p47 = scmp.ne.s32.totalorder %s36, %s37
    %p48 = scmp.eq.s32.totalorder %s14, 0
    %p49 = por %p47, %p48
    %p50 = scmp.ne.s32.totalorder %s36, %s37
    %p51 = scmp.eq.s32.totalorder %s15, 1
    %p52 = por %p50, %p51
    %p54 = scmp.ne.s32.totalorder %s37, %s53
    %p55 = scmp.eq.s32.totalorder %s15, 0
    %p56 = por %p54, %p55
    %s58 = sadd.s32 %s57, 1
    %p61 = scmp.eq.s32.totalorder %s9, 1
    %p62 = scmp.ne.s32.totalorder %s57, %s59
    %p63 = scmp.eq.s32.totalorder %s9, 0
    %p64 = por %p62, %p63
    %p65 = scmp.ne.s32.totalorder %s57, %s59
    %p66 = scmp.eq.s32.totalorder %s14, 1
    %p67 = por %p65, %p66
    %p68 = scmp.ne.s32.totalorder %s59, %s60
    %p69 = scmp.eq.s32.totalorder %s14, 0
    %p70 = por %p68, %p69
    %p71 = scmp.ne.s32.totalorder %s59, %s60
    %p72 = scmp.eq.s32.totalorder %s15, 1
    %p73 = por %p71, %p72
    %p75 = scmp.ne.s32.totalorder %s60, %s74
    %p76 = scmp.eq.s32.totalorder %s15, 0
    %p77 = por %p75, %p76
    %s79 = sadd.s32 %s78, 1
    %p82 = scmp.eq.s32.totalorder %s9, 1
    %p83 = scmp.ne.s32.totalorder %s78, %s80
    %p84 = scmp.eq.s32.totalorder %s9, 0
    %p85 = por %p83, %p84
    %p86 = scmp.ne.s32.totalorder %s78, %s80
    %p87 = scmp.eq.s32.totalorder %s14, 1
    %p88 = por %p86, %p87
    %p89 = scmp.ne.s32.totalorder %s80, %s81
    %p90 = scmp.eq.s32.totalorder %s14, 0
    %p91 = por %p89, %p90
    %p92 = scmp.ne.s32.totalorder %s80, %s81
    %p93 = scmp.eq.s32.totalorder %s15, 1
    %p94 = por %p92, %p93
    %p96 = scmp.ne.s32.totalorder %s81, %s95
    %p97 = scmp.eq.s32.totalorder %s15, 0
    %p98 = por %p96, %p97
    %s99 = ssub.s32 %s16, %s28
    %s100 = ssub.s32 %s17, %s24
    %s101 = sor.u32 %s99, %s100
    %p102 = scmp.eq.s32.totalorder %s101, 0
    %s104 = sadd.s32 %s103, 1
    %s105 = scalar_select %p102, %s103, %s104
    %p108 = pneg %p102
    %p109 = scmp.eq.s32.totalorder %s9, 1
    %p110 = por %p108, %p109
    %p111 = scmp.ne.s32.totalorder %s103, %s106
    %p112 = scmp.eq.s32.totalorder %s9, 0
    %p113 = por %p111, %p112
    %p114 = scmp.ne.s32.totalorder %s103, %s106
    %p115 = scmp.eq.s32.totalorder %s14, 1
    %p116 = por %p114, %p115
    %p117 = scmp.ne.s32.totalorder %s106, %s107
    %p118 = scmp.eq.s32.totalorder %s14, 0
    %p119 = por %p117, %p118
    %p120 = scmp.ne.s32.totalorder %s106, %s107
    %p121 = scmp.eq.s32.totalorder %s15, 1
    %p122 = por %p120, %p121
    %p124 = scmp.ne.s32.totalorder %s107, %s123
    %p125 = scmp.eq.s32.totalorder %s15, 0
    %p126 = por %p124, %p125
    %p127 = scmp.le.s32.totalorder 1, %s9
    %p128 = scmp.lt.s32.totalorder %s9, 3
    %p129 = pnand %p127, %p128
    %p130 = pneg %p129
    // Predicated region
    $region9: #{pixel_map_estimator_bn.5} parent=5 // pred_check
      _
    $region10: #{pixel_map_estimator_bn.5} parent=5 // pred_check_branch
      %132 = sbr.rel (%p129) target = $region12
    $region11: #{pixel_map_estimator_bn.5} parent=5 // pred_region
      %s133 = ssub.s32 %s9, 1
      // Predicated region
      $region13: #{pixel_map_estimator_bn.5} parent=11 // pred_check
        %p134 = pneg %p70
      $region14: #{pixel_map_estimator_bn.5} parent=11 // pred_check_branch
        %136 = sbr.rel (%p134) target = $region16
      $region15: #{pixel_map_estimator_bn.5} parent=11 // pred_region
        _
      $region16: #{pixel_map_estimator_bn.5} parent=11 // pred_fallthru
        _
      // Predicated region
      $region17: #{pixel_map_estimator_bn.5} parent=11 // pred_check
        %p137 = pneg %p91
      $region18: #{pixel_map_estimator_bn.5} parent=11 // pred_check_branch
        %139 = sbr.rel (%p137) target = $region20
      $region19: #{pixel_map_estimator_bn.5} parent=11 // pred_region
        _
      $region20: #{pixel_map_estimator_bn.5} parent=11 // pred_fallthru
        _
    $region12: #{pixel_map_estimator_bn.5} parent=5 // pred_fallthru
      _
    %p140 = scmp.lt.s32.totalorder %s9, 2
    // Predicated region
    $region21: #{pixel_map_estimator_bn.5} parent=5 // pred_check
      %p141 = pneg %p140
    $region22: #{pixel_map_estimator_bn.5} parent=5 // pred_check_branch
      %143 = sbr.rel (%p141) target = $region24
    $region23: #{pixel_map_estimator_bn.5} parent=5 // pred_region
      // Predicated region
      $region25: #{pixel_map_estimator_bn.5} parent=23 // pred_check
        %p144 = pneg %p43
      $region26: #{pixel_map_estimator_bn.5} parent=23 // pred_check_branch
        %146 = sbr.rel (%p144) target = $region28
      $region27: #{pixel_map_estimator_bn.5} parent=23 // pred_region
        %s147 = smul.u32 2, %s17
        %p148 = scmp.lt.s32.totalorder %s16, 1
        %s149 = scalar_select %p148, %s16, 1
        %p150 = scmp.lt.s32.totalorder %s147, 1
        %s151 = scalar_select %p150, %s147, 1
        %s152 = smul.addr %s149, 2
        %s153 = sadd.s32 %s151, %s152
        %s154 = smul.addr %s153, 4
        %s155 = scalar_lea.vmem %s0, %s154
        %s156 = smul.u32 2, %s17
      $region28: #{pixel_map_estimator_bn.5} parent=23 // pred_fallthru
        _
    $region24: #{pixel_map_estimator_bn.5} parent=5 // pred_fallthru
      _
    %p157 = scmp.le.s32.totalorder 1, %s9
    %p158 = scmp.lt.s32.totalorder %s9, 3
    %p159 = pnand %p157, %p158
    %p160 = pneg %p159
    // Predicated region
    $region29: #{pixel_map_estimator_bn.5} parent=5 // pred_check
      _
    $region30: #{pixel_map_estimator_bn.5} parent=5 // pred_check_branch
      %162 = sbr.rel (%p159) target = $region32
    $region31: #{pixel_map_estimator_bn.5} parent=5 // pred_region
      %s163 = ssub.s32 %s9, 1
      %s164 = smul.u32 2, %s19
      %p165 = scmp.lt.s32.totalorder %s18, 1
      %s166 = scalar_select %p165, %s18, 1
      %p167 = scmp.lt.s32.totalorder %s164, 1
      %s168 = scalar_select %p167, %s164, 1
      %s169 = smul.addr %s166, 2
      %s170 = sadd.s32 %s168, %s169
      %s171 = smul.addr %s170, 4
      %s172 = scalar_lea.vmem %s0, %s171
      %p173 = pneg %p49
      %p174 = pneg %p46
      %p175 = pneg %p70
      %p176 = pneg %p67
      %p177 = pneg %p91
      %p178 = pneg %p88
      %p179 = pneg %p119
      %p180 = pneg %p116
      %s181 = smul.u32 2, %s19
      %p182 = scmp.lt.s32.totalorder %s18, 1
      %s183 = scalar_select %p182, %s18, 1
      %p184 = scmp.lt.s32.totalorder %s181, 1
      %s185 = scalar_select %p184, %s181, 1
      %s186 = smul.addr %s183, 2
      %s187 = sadd.s32 %s185, %s186
      %s188 = smul.addr %s187, 4
      %s189 = scalar_lea.vmem %s3, %s188
      %s190 = smul.u32 2, %s19
      %p191 = scmp.lt.s32.totalorder %s18, 1
      %s192 = scalar_select %p191, %s18, 1
      %p193 = scmp.lt.s32.totalorder %s190, 1
      %s194 = scalar_select %p193, %s190, 1
      %s195 = smul.addr %s192, 2
      %s196 = sadd.s32 %s194, %s195
      %s197 = smul.addr %s196, 4
      %s198 = scalar_lea.vmem %s0, %s197
      %s199 = smul.u32 2, %s19
      %s200 = smul.u32 2, %s19
      %p201 = scmp.lt.s32.totalorder %s18, 1
      %s202 = scalar_select %p201, %s18, 1
      %p203 = scmp.lt.s32.totalorder %s200, 1
      %s204 = scalar_select %p203, %s200, 1
      %s205 = smul.addr %s202, 2
      %s206 = sadd.s32 %s204, %s205
      %s207 = smul.addr %s206, 4
      %s208 = scalar_lea.vmem %s3, %s207
      %s209 = smul.u32 2, %s19
      %v210 = vld [vmem:[%s198] sm:$0xff]
      %v211 = vld [vmem:[%s1] sm:$0xf]
      %213 = vset.pattern.permute.xlu0 0
      %214 = vperm.xlu0 %213, %v211
      %v215 = vpop.permute.xlu0 %214
      %218 = vst [vmem:[#allocation1] ss:$2 sm:$0xff] %v210
      %v219 = vld.sshfl [vmem:[#allocation1] sm:$0xff pattern:$0x75316420]
      %v220 = vld.sshfl [vmem:[#allocation1 + $0x8] sm:$0xff pattern:$0x75316420]
      %v223 = vmul.f32 %v215, %v219
      %v224 = vmul.f32 %v215, %v220
      %v225 = vld [vmem:[%s2] sm:$0xf]
      %227 = vset.pattern.permute.xlu0 0
      %228 = vperm.xlu0 %227, %v225
      %v229 = vpop.permute.xlu0 %228
      %v231 = vadd.f32 %v223, %v229
      %v232 = vadd.f32 %v224, %v229
      %v233 = vmax.f32 %v231, 0.0
      %v234 = vmax.f32 %v232, 0.0
      %v237 = vrot.slane %v234, 4
      %vm238 = vcmask 1043456
      %v239 = vsel %vm238, %v233, %v237
      %241 = vst [vmem:[%s208] sm:$0xff] %v239
      %s242 = smul.u32 2, %s19
      %p243 = scmp.lt.s32.totalorder %s18, 1
      %s244 = scalar_select %p243, %s18, 1
      %p245 = scmp.lt.s32.totalorder %s242, 1
      %s246 = scalar_select %p245, %s242, 1
      %s247 = smul.addr %s244, 2
      %s248 = sadd.s32 %s246, %s247
      %s249 = smul.addr %s248, 4
      %s250 = scalar_lea.vmem %s3, %s249
      // Predicated region
      $region33: #{pixel_map_estimator_bn.5} parent=31 // pred_check
        %p251 = pneg %p116
      $region34: #{pixel_map_estimator_bn.5} parent=31 // pred_check_branch
        %253 = sbr.rel (%p251) target = $region36
      $region35: #{pixel_map_estimator_bn.5} parent=31 // pred_region
        %s254 = smul.u32 2, %s19
      $region36: #{pixel_map_estimator_bn.5} parent=31 // pred_fallthru
        _
    $region32: #{pixel_map_estimator_bn.5} parent=5 // pred_fallthru
      _
    %p255 = scmp.le.s32.totalorder 2, %s9
    // Predicated region
    $region37: #{pixel_map_estimator_bn.5} parent=5 // pred_check
      %p256 = pneg %p255
    $region38: #{pixel_map_estimator_bn.5} parent=5 // pred_check_branch
      %258 = sbr.rel (%p256) target = $region40
    $region39: #{pixel_map_estimator_bn.5} parent=5 // pred_region
      %s259 = ssub.s32 %s9, 2
      // Predicated region
      $region41: #{pixel_map_estimator_bn.5} parent=39 // pred_check
        %p260 = pneg %p122
      $region42: #{pixel_map_estimator_bn.5} parent=39 // pred_check_branch
        %262 = sbr.rel (%p260) target = $region44
      $region43: #{pixel_map_estimator_bn.5} parent=39 // pred_region
        %s263 = smul.u32 2, %s21
        %p264 = scmp.lt.s32.totalorder %s20, 1
        %s265 = scalar_select %p264, %s20, 1
        %p266 = scmp.lt.s32.totalorder %s263, 1
        %s267 = scalar_select %p266, %s263, 1
        %s268 = smul.addr %s265, 2
        %s269 = sadd.s32 %s267, %s268
        %s270 = smul.addr %s269, 4
        %s271 = scalar_lea.vmem %s3, %s270
      $region44: #{pixel_map_estimator_bn.5} parent=39 // pred_fallthru
        _
    $region40: #{pixel_map_estimator_bn.5} parent=5 // pred_fallthru
      _
  $region6: #{pixel_map_estimator_bn.5} parent=0 // loop_footer
    %s13 = sadd.s32 1, %s9
  $region7: #{pixel_map_estimator_bn.5} parent=0 // loop_footer_branch
    %8 = sbr.rel target = $region3
  $region8: #{pixel_map_estimator_bn.5} parent=0 // loop_exit
    _

// kernel: pixel_map_estimator_bn.4
$region0: #{pixel_map_estimator_bn.4}
  #allocation0 [shape = 'u32[]', space=smem, size = 0x4, offset = 0x4, fixed_abs, tag = 'smem constant byte address 0x4 - core index']
  #allocation1 [shape = 'u32[72,128]{1,0:T(1,128)}', space=vmem, size = 0x9000, scoped, tag = 'internal scratch']
  %s0 = inlined_call_operand.vmem [shape: f32[2,8,256], index: 0, kind: input, shape index: {}]
  %s1 = inlined_call_operand.vmem [shape: f32[8,8], index: 1, kind: input, shape index: {}]
  %s2 = inlined_call_operand.vmem [shape: f32[8,1], index: 2, kind: input, shape index: {}]
  %s3 = inlined_call_operand.vmem [shape: f32[4,8], index: 3, kind: input, shape index: {}]
  %s4 = inlined_call_operand.vmem [shape: f32[2,4,2], index: 4, kind: output, shape index: {0}]
  %s5 = inlined_call_operand.vmem [shape: f32[2,4,256], index: 5, kind: output, shape index: {1}]
  %6 = xla_tuple %s4, %s5
  %s7 = sld [smem:[#allocation0]]
  $region61: #{pixel_map_estimator_bn.4} parent=0
    _
  %s9 = ssub.s32 1, %s7
  %s10 = scalar_select 0, %s9, %s7
  loop: start=0, step=1, limit=4
  $region2: #{pixel_map_estimator_bn.4} parent=0 // loop_pre_header
    _
  $region3: #{pixel_map_estimator_bn.4} parent=0 // loop_header
    %s12 = sphi 0, %s16
    %p13 = scmp.ge.s32.totalorder %s12, 4
    %s19 = sphi 0, %s31
    %s20 = sphi 0, %s27
    %s21 = sphi 0, %s19
    %s22 = sphi 0, %s20
    %s23 = sphi 0, %s21
    %s24 = sphi 0, %s22
    %s36 = sphi 0, %s38
    %s39 = sphi 0, %s36
    %s40 = sphi 0, %s39
    %s56 = sphi 0, %s40
    %s60 = sphi 0, %s60
    %s62 = sphi 0, %s60
    %s63 = sphi 0, %s62
    %s77 = sphi 0, %s63
    %s81 = sphi 0, %s81
    %s83 = sphi 0, %s81
    %s84 = sphi 0, %s83
    %s98 = sphi 0, %s84
    %s102 = sphi 0, %s102
    %s104 = sphi 0, %s102
    %s105 = sphi 0, %s104
    %s119 = sphi 0, %s105
    %s125 = sphi 0, %s127
    %s128 = sphi 0, %s125
    %s129 = sphi 0, %s128
    %s145 = sphi 0, %s129
    %s153 = sphi 0, %s155
    %s156 = sphi 0, %s153
    %s157 = sphi 0, %s156
    %s173 = sphi 0, %s157
  $region4: #{pixel_map_estimator_bn.4} parent=0 // loop_header_branch
    %15 = sbr.rel (%p13) target = $region8
  $region5: #{pixel_map_estimator_bn.4} parent=0 // loop_body
    %s17 = ssub.s32 %s12, 1
    %s18 = ssub.s32 %s12, 2
    %s25 = sadd.s32 1, %s20
    %p26 = scmp.ge.s32.totalorder %s25, 1
    %s27 = scalar_select %p26, 0, %s25
    %s28 = sadd.s32 1, %s19
    %s29 = scalar_select %p26, %s28, %s19
    %p30 = scmp.ge.s32.totalorder %s29, 2
    %s31 = scalar_select %p30, 0, %s29
    %s32 = ssub.s32 %s19, %s31
    %s33 = ssub.s32 %s20, %s27
    %s34 = sor.u32 %s32, %s33
    %p35 = scmp.eq.s32.totalorder %s34, 0
    %s37 = sadd.s32 %s36, 1
    %s38 = scalar_select %p35, %s36, %s37
    %p41 = pneg %p35
    %p42 = scmp.eq.s32.totalorder %s12, 1
    %p43 = por %p41, %p42
    %p44 = scmp.ne.s32.totalorder %s36, %s39
    %p45 = scmp.eq.s32.totalorder %s12, 0
    %p46 = por %p44, %p45
    %p47 = scmp.ne.s32.totalorder %s36, %s39
    %p48 = scmp.eq.s32.totalorder %s17, 1
    %p49 = por %p47, %p48
    %p50 = scmp.ne.s32.totalorder %s39, %s40
    %p51 = scmp.eq.s32.totalorder %s17, 0
    %p52 = por %p50, %p51
    %p53 = scmp.ne.s32.totalorder %s39, %s40
    %p54 = scmp.eq.s32.totalorder %s18, 1
    %p55 = por %p53, %p54
    %p57 = scmp.ne.s32.totalorder %s40, %s56
    %p58 = scmp.eq.s32.totalorder %s18, 0
    %p59 = por %p57, %p58
    %s61 = sadd.s32 %s60, 1
    %p64 = scmp.eq.s32.totalorder %s12, 1
    %p65 = scmp.ne.s32.totalorder %s60, %s62
    %p66 = scmp.eq.s32.totalorder %s12, 0
    %p67 = por %p65, %p66
    %p68 = scmp.ne.s32.totalorder %s60, %s62
    %p69 = scmp.eq.s32.totalorder %s17, 1
    %p70 = por %p68, %p69
    %p71 = scmp.ne.s32.totalorder %s62, %s63
    %p72 = scmp.eq.s32.totalorder %s17, 0
    %p73 = por %p71, %p72
    %p74 = scmp.ne.s32.totalorder %s62, %s63
    %p75 = scmp.eq.s32.totalorder %s18, 1
    %p76 = por %p74, %p75
    %p78 = scmp.ne.s32.totalorder %s63, %s77
    %p79 = scmp.eq.s32.totalorder %s18, 0
    %p80 = por %p78, %p79
    %s82 = sadd.s32 %s81, 1
    %p85 = scmp.eq.s32.totalorder %s12, 1
    %p86 = scmp.ne.s32.totalorder %s81, %s83
    %p87 = scmp.eq.s32.totalorder %s12, 0
    %p88 = por %p86, %p87
    %p89 = scmp.ne.s32.totalorder %s81, %s83
    %p90 = scmp.eq.s32.totalorder %s17, 1
    %p91 = por %p89, %p90
    %p92 = scmp.ne.s32.totalorder %s83, %s84
    %p93 = scmp.eq.s32.totalorder %s17, 0
    %p94 = por %p92, %p93
    %p95 = scmp.ne.s32.totalorder %s83, %s84
    %p96 = scmp.eq.s32.totalorder %s18, 1
    %p97 = por %p95, %p96
    %p99 = scmp.ne.s32.totalorder %s84, %s98
    %p100 = scmp.eq.s32.totalorder %s18, 0
    %p101 = por %p99, %p100
    %s103 = sadd.s32 %s102, 1
    %p106 = scmp.eq.s32.totalorder %s12, 1
    %p107 = scmp.ne.s32.totalorder %s102, %s104
    %p108 = scmp.eq.s32.totalorder %s12, 0
    %p109 = por %p107, %p108
    %p110 = scmp.ne.s32.totalorder %s102, %s104
    %p111 = scmp.eq.s32.totalorder %s17, 1
    %p112 = por %p110, %p111
    %p113 = scmp.ne.s32.totalorder %s104, %s105
    %p114 = scmp.eq.s32.totalorder %s17, 0
    %p115 = por %p113, %p114
    %p116 = scmp.ne.s32.totalorder %s104, %s105
    %p117 = scmp.eq.s32.totalorder %s18, 1
    %p118 = por %p116, %p117
    %p120 = scmp.ne.s32.totalorder %s105, %s119
    %p121 = scmp.eq.s32.totalorder %s18, 0
    %p122 = por %p120, %p121
    %s123 = ssub.s32 %s19, %s31
    %p124 = scmp.eq.s32.totalorder %s123, 0
    %s126 = sadd.s32 %s125, 1
    %s127 = scalar_select %p124, %s125, %s126
    %p130 = pneg %p124
    %p131 = scmp.eq.s32.totalorder %s12, 1
    %p132 = por %p130, %p131
    %p133 = scmp.ne.s32.totalorder %s125, %s128
    %p134 = scmp.eq.s32.totalorder %s12, 0
    %p135 = por %p133, %p134
    %p136 = scmp.ne.s32.totalorder %s125, %s128
    %p137 = scmp.eq.s32.totalorder %s17, 1
    %p138 = por %p136, %p137
    %p139 = scmp.ne.s32.totalorder %s128, %s129
    %p140 = scmp.eq.s32.totalorder %s17, 0
    %p141 = por %p139, %p140
    %p142 = scmp.ne.s32.totalorder %s128, %s129
    %p143 = scmp.eq.s32.totalorder %s18, 1
    %p144 = por %p142, %p143
    %p146 = scmp.ne.s32.totalorder %s129, %s145
    %p147 = scmp.eq.s32.totalorder %s18, 0
    %p148 = por %p146, %p147
    %s149 = ssub.s32 %s19, %s31
    %s150 = ssub.s32 %s20, %s27
    %s151 = sor.u32 %s149, %s150
    %p152 = scmp.eq.s32.totalorder %s151, 0
    %s154 = sadd.s32 %s153, 1
    %s155 = scalar_select %p152, %s153, %s154
    %p158 = pneg %p152
    %p159 = scmp.eq.s32.totalorder %s12, 1
    %p160 = por %p158, %p159
    %p161 = scmp.ne.s32.totalorder %s153, %s156
    %p162 = scmp.eq.s32.totalorder %s12, 0
    %p163 = por %p161, %p162
    %p164 = scmp.ne.s32.totalorder %s153, %s156
    %p165 = scmp.eq.s32.totalorder %s17, 1
    %p166 = por %p164, %p165
    %p167 = scmp.ne.s32.totalorder %s156, %s157
    %p168 = scmp.eq.s32.totalorder %s17, 0
    %p169 = por %p167, %p168
    %p170 = scmp.ne.s32.totalorder %s156, %s157
    %p171 = scmp.eq.s32.totalorder %s18, 1
    %p172 = por %p170, %p171
    %p174 = scmp.ne.s32.totalorder %s157, %s173
    %p175 = scmp.eq.s32.totalorder %s18, 0
    %p176 = por %p174, %p175
    %p177 = scmp.le.s32.totalorder 1, %s12
    %p178 = scmp.lt.s32.totalorder %s12, 3
    %p179 = pnand %p177, %p178
    %p180 = pneg %p179
    // Predicated region
    $region9: #{pixel_map_estimator_bn.4} parent=5 // pred_check
      _
    $region10: #{pixel_map_estimator_bn.4} parent=5 // pred_check_branch
      %182 = sbr.rel (%p179) target = $region12
    $region11: #{pixel_map_estimator_bn.4} parent=5 // pred_region
      %s183 = ssub.s32 %s12, 1
      // Predicated region
      $region13: #{pixel_map_estimator_bn.4} parent=11 // pred_check
        %p184 = pneg %p73
      $region14: #{pixel_map_estimator_bn.4} parent=11 // pred_check_branch
        %186 = sbr.rel (%p184) target = $region16
      $region15: #{pixel_map_estimator_bn.4} parent=11 // pred_region
        _
      $region16: #{pixel_map_estimator_bn.4} parent=11 // pred_fallthru
        _
      // Predicated region
      $region17: #{pixel_map_estimator_bn.4} parent=11 // pred_check
        %p187 = pneg %p94
      $region18: #{pixel_map_estimator_bn.4} parent=11 // pred_check_branch
        %189 = sbr.rel (%p187) target = $region20
      $region19: #{pixel_map_estimator_bn.4} parent=11 // pred_region
        _
      $region20: #{pixel_map_estimator_bn.4} parent=11 // pred_fallthru
        _
      // Predicated region
      $region21: #{pixel_map_estimator_bn.4} parent=11 // pred_check
        %p190 = pneg %p115
      $region22: #{pixel_map_estimator_bn.4} parent=11 // pred_check_branch
        %192 = sbr.rel (%p190) target = $region24
      $region23: #{pixel_map_estimator_bn.4} parent=11 // pred_region
        _
      $region24: #{pixel_map_estimator_bn.4} parent=11 // pred_fallthru
        _
    $region12: #{pixel_map_estimator_bn.4} parent=5 // pred_fallthru
      _
    %p193 = scmp.lt.s32.totalorder %s12, 2
    // Predicated region
    $region25: #{pixel_map_estimator_bn.4} parent=5 // pred_check
      %p194 = pneg %p193
    $region26: #{pixel_map_estimator_bn.4} parent=5 // pred_check_branch
      %196 = sbr.rel (%p194) target = $region28
    $region27: #{pixel_map_estimator_bn.4} parent=5 // pred_region
      // Predicated region
      $region29: #{pixel_map_estimator_bn.4} parent=27 // pred_check
        %p197 = pneg %p46
      $region30: #{pixel_map_estimator_bn.4} parent=27 // pred_check_branch
        %199 = sbr.rel (%p197) target = $region32
      $region31: #{pixel_map_estimator_bn.4} parent=27 // pred_region
        %s200 = smul.u32 2, %s20
        %p201 = scmp.lt.s32.totalorder %s19, 1
        %s202 = scalar_select %p201, %s19, 1
        %p203 = scmp.lt.s32.totalorder %s200, 1
        %s204 = scalar_select %p203, %s200, 1
        %s205 = smul.addr %s202, 2
        %s206 = sadd.s32 %s204, %s205
        %s207 = smul.addr %s206, 8
        %s208 = scalar_lea.vmem %s0, %s207
        %s209 = smul.u32 2, %s20
      $region32: #{pixel_map_estimator_bn.4} parent=27 // pred_fallthru
        _
    $region28: #{pixel_map_estimator_bn.4} parent=5 // pred_fallthru
      _
    %p210 = scmp.le.s32.totalorder 1, %s12
    %p211 = scmp.lt.s32.totalorder %s12, 3
    %p212 = pnand %p210, %p211
    %p213 = pneg %p212
    // Predicated region
    $region33: #{pixel_map_estimator_bn.4} parent=5 // pred_check
      _
    $region34: #{pixel_map_estimator_bn.4} parent=5 // pred_check_branch
      %215 = sbr.rel (%p212) target = $region36
    $region35: #{pixel_map_estimator_bn.4} parent=5 // pred_region
      %s216 = ssub.s32 %s12, 1
      %s217 = smul.u32 2, %s22
      %p218 = scmp.lt.s32.totalorder %s21, 1
      %s219 = scalar_select %p218, %s21, 1
      %p220 = scmp.lt.s32.totalorder %s217, 1
      %s221 = scalar_select %p220, %s217, 1
      %s222 = smul.addr %s219, 2
      %s223 = sadd.s32 %s221, %s222
      %s224 = smul.addr %s223, 8
      %s225 = scalar_lea.vmem %s0, %s224
      %p226 = pneg %p52
      %p227 = pneg %p49
      %p228 = pneg %p73
      %p229 = pneg %p70
      %p230 = pneg %p94
      %p231 = pneg %p91
      %p232 = pneg %p115
      %p233 = pneg %p112
      %p234 = pneg %p141
      %p235 = pneg %p138
      %p236 = scmp.lt.s32.totalorder %s21, 1
      %s237 = scalar_select %p236, %s21, 1
      %s238 = smul.addr %s237, 4
      %s239 = scalar_lea.vmem %s4, %s238
      %p240 = pneg %p169
      %p241 = pneg %p166
      %s242 = smul.u32 2, %s22
      %p243 = scmp.lt.s32.totalorder %s21, 1
      %s244 = scalar_select %p243, %s21, 1
      %p245 = scmp.lt.s32.totalorder %s242, 1
      %s246 = scalar_select %p245, %s242, 1
      %s247 = smul.addr %s244, 2
      %s248 = sadd.s32 %s246, %s247
      %s249 = smul.addr %s248, 4
      %s250 = scalar_lea.vmem %s5, %s249
      %s251 = smul.u32 2, %s22
      %p252 = scmp.lt.s32.totalorder %s21, 1
      %s253 = scalar_select %p252, %s21, 1
      %p254 = scmp.lt.s32.totalorder %s251, 1
      %s255 = scalar_select %p254, %s251, 1
      %s256 = smul.addr %s253, 2
      %s257 = sadd.s32 %s255, %s256
      %s258 = smul.addr %s257, 8
      %s259 = scalar_lea.vmem %s0, %s258
      %s260 = smul.u32 2, %s22
      %p261 = scmp.lt.s32.totalorder %s21, 1
      %s262 = scalar_select %p261, %s21, 1
      %s263 = smul.addr %s262, 4
      %s264 = scalar_lea.vmem %s4, %s263
      %s265 = smul.u32 2, %s22
      %p266 = scmp.lt.s32.totalorder %s21, 1
      %s267 = scalar_select %p266, %s21, 1
      %p268 = scmp.lt.s32.totalorder %s265, 1
      %s269 = scalar_select %p268, %s265, 1
      %s270 = smul.addr %s267, 2
      %s271 = sadd.s32 %s269, %s270
      %s272 = smul.addr %s271, 4
      %s273 = scalar_lea.vmem %s5, %s272
      %s274 = smul.u32 2, %s22
      %p275 = scmp.eq.s32.totalorder %s22, 0
      // Predicated region
      $region37: #{pixel_map_estimator_bn.4} parent=35 // pred_check
        %p276 = pneg %p275
      $region38: #{pixel_map_estimator_bn.4} parent=35 // pred_check_branch
        %278 = sbr.rel (%p276) target = $region40
      $region39: #{pixel_map_estimator_bn.4} parent=35 // pred_region
        %vm279 = vcmask 11264
        %280 = vst.msk [vmem:[%s264] sm:$0xf] %vm279, 0.0
      $region40: #{pixel_map_estimator_bn.4} parent=35 // pred_fallthru
        _
      %v281 = vld [vmem:[%s259] sm:$0xff]
      %v282 = vld [vmem:[%s259 + $0x8] sm:$0xff]
      %v283 = vld [vmem:[%s1] sm:$0xff]
      %285 = vset.pattern.permute.xlu0 0
      %286 = vperm.xlu0 %285, %v283
      %v287 = vpop.permute.xlu0 %286
      %v289 = vperm.slane %v281, 0
      %v290 = vperm.slane %v282, 0
      %v291 = vmul.f32 %v287, %v289
      %v292 = vmul.f32 %v287, %v290
      %293 = vset.pattern.permute.xlu0 1
      %294 = vperm.xlu0 %293, %v283
      %v295 = vpop.permute.xlu0 %294
      %v297 = vperm.slane %v281, 1
      %v298 = vperm.slane %v282, 1
      %v299 = vmul.f32 %v295, %v297
      %v300 = vmul.f32 %v295, %v298
      %v301 = vadd.f32 %v291, %v299
      %v302 = vadd.f32 %v292, %v300
      %303 = vset.pattern.permute.xlu0 2
      %304 = vperm.xlu0 %303, %v283
      %v305 = vpop.permute.xlu0 %304
      %v307 = vperm.slane %v281, 2
      %v308 = vperm.slane %v282, 2
      %v309 = vmul.f32 %v305, %v307
      %v310 = vmul.f32 %v305, %v308
      %v311 = vadd.f32 %v301, %v309
      %v312 = vadd.f32 %v302, %v310
      %313 = vset.pattern.permute.xlu0 3
      %314 = vperm.xlu0 %313, %v283
      %v315 = vpop.permute.xlu0 %314
      %v317 = vperm.slane %v281, 3
      %v318 = vperm.slane %v282, 3
      %v319 = vmul.f32 %v315, %v317
      %v320 = vmul.f32 %v315, %v318
      %v321 = vadd.f32 %v311, %v319
      %v322 = vadd.f32 %v312, %v320
      %323 = vset.pattern.permute.xlu0 4
      %324 = vperm.xlu0 %323, %v283
      %v325 = vpop.permute.xlu0 %324
      %v327 = vperm.slane %v281, 4
      %v328 = vperm.slane %v282, 4
      %v329 = vmul.f32 %v325, %v327
      %v330 = vmul.f32 %v325, %v328
      %v331 = vadd.f32 %v321, %v329
      %v332 = vadd.f32 %v322, %v330
      %333 = vset.pattern.permute.xlu0 5
      %334 = vperm.xlu0 %333, %v283
      %v335 = vpop.permute.xlu0 %334
      %v337 = vperm.slane %v281, 5
      %v338 = vperm.slane %v282, 5
      %v339 = vmul.f32 %v335, %v337
      %v340 = vmul.f32 %v335, %v338
      %v341 = vadd.f32 %v331, %v339
      %v342 = vadd.f32 %v332, %v340
      %343 = vset.pattern.permute.xlu0 6
      %344 = vperm.xlu0 %343, %v283
      %v345 = vpop.permute.xlu0 %344
      %v347 = vperm.slane %v281, 6
      %v348 = vperm.slane %v282, 6
      %v349 = vmul.f32 %v345, %v347
      %v350 = vmul.f32 %v345, %v348
      %v351 = vadd.f32 %v341, %v349
      %v352 = vadd.f32 %v342, %v350
      %353 = vset.pattern.permute.xlu0 7
      %354 = vperm.xlu0 %353, %v283
      %v355 = vpop.permute.xlu0 %354
      %v357 = vperm.slane %v281, 7
      %v358 = vperm.slane %v282, 7
      %v359 = vmul.f32 %v355, %v357
      %v360 = vmul.f32 %v355, %v358
      %v361 = vadd.f32 %v351, %v359
      %v362 = vadd.f32 %v352, %v360
      %v363 = vld [vmem:[%s2] sm:$0xff]
      %365 = vset.pattern.permute.xlu0 0
      %366 = vperm.xlu0 %365, %v363
      %v367 = vpop.permute.xlu0 %366
      %v369 = vadd.f32 %v361, %v367
      %v370 = vadd.f32 %v362, %v367
      %v371 = vmax.f32 %v369, 0.0
      %v372 = vmax.f32 %v370, 0.0
      %v373 = vld [vmem:[%s3] sm:$0xf]
      %375 = vset.pattern.permute.xlu0 0
      %376 = vperm.xlu0 %375, %v373
      %v377 = vpop.permute.xlu0 %376
      %v379 = vperm.slane %v371, 0
      %v380 = vperm.slane %v372, 0
      %v381 = vmul.f32 %v377, %v379
      %v382 = vmul.f32 %v377, %v380
      %383 = vset.pattern.permute.xlu0 1
      %384 = vperm.xlu0 %383, %v373
      %v385 = vpop.permute.xlu0 %384
      %v387 = vperm.slane %v371, 1
      %v388 = vperm.slane %v372, 1
      %v389 = vmul.f32 %v385, %v387
      %v390 = vmul.f32 %v385, %v388
      %v391 = vadd.f32 %v381, %v389
      %v392 = vadd.f32 %v382, %v390
      %393 = vset.pattern.permute.xlu0 2
      %394 = vperm.xlu0 %393, %v373
      %v395 = vpop.permute.xlu0 %394
      %v397 = vperm.slane %v371, 2
      %v398 = vperm.slane %v372, 2
      %v399 = vmul.f32 %v395, %v397
      %v400 = vmul.f32 %v395, %v398
      %v401 = vadd.f32 %v391, %v399
      %v402 = vadd.f32 %v392, %v400
      %403 = vset.pattern.permute.xlu0 3
      %404 = vperm.xlu0 %403, %v373
      %v405 = vpop.permute.xlu0 %404
      %v407 = vperm.slane %v371, 3
      %v408 = vperm.slane %v372, 3
      %v409 = vmul.f32 %v405, %v407
      %v410 = vmul.f32 %v405, %v408
      %v411 = vadd.f32 %v401, %v409
      %v412 = vadd.f32 %v402, %v410
      %413 = vset.pattern.permute.xlu0 4
      %414 = vperm.xlu0 %413, %v373
      %v415 = vpop.permute.xlu0 %414
      %v417 = vperm.slane %v371, 4
      %v418 = vperm.slane %v372, 4
      %v419 = vmul.f32 %v415, %v417
      %v420 = vmul.f32 %v415, %v418
      %v421 = vadd.f32 %v411, %v419
      %v422 = vadd.f32 %v412, %v420
      %423 = vset.pattern.permute.xlu0 5
      %424 = vperm.xlu0 %423, %v373
      %v425 = vpop.permute.xlu0 %424
      %v427 = vperm.slane %v371, 5
      %v428 = vperm.slane %v372, 5
      %v429 = vmul.f32 %v425, %v427
      %v430 = vmul.f32 %v425, %v428
      %v431 = vadd.f32 %v421, %v429
      %v432 = vadd.f32 %v422, %v430
      %433 = vset.pattern.permute.xlu0 6
      %434 = vperm.xlu0 %433, %v373
      %v435 = vpop.permute.xlu0 %434
      %v437 = vperm.slane %v371, 6
      %v438 = vperm.slane %v372, 6
      %v439 = vmul.f32 %v435, %v437
      %v440 = vmul.f32 %v435, %v438
      %v441 = vadd.f32 %v431, %v439
      %v442 = vadd.f32 %v432, %v440
      %443 = vset.pattern.permute.xlu0 7
      %444 = vperm.xlu0 %443, %v373
      %v445 = vpop.permute.xlu0 %444
      %v447 = vperm.slane %v371, 7
      %v448 = vperm.slane %v372, 7
      %v449 = vmul.f32 %v445, %v447
      %v450 = vmul.f32 %v445, %v448
      %v451 = vadd.f32 %v441, %v449
      %v452 = vadd.f32 %v442, %v450
      %v455 = vrot.slane %v452, 4
      %vm456 = vcmask 1043456
      %v457 = vsel %vm456, %v451, %v455
      %459 = vst [vmem:[%s273] sm:$0xff] %v457
      %v460 = vld [vmem:[%s264] sm:$0xf]
      %v461 = vsel %vm456, %v451, 0.0
      %v462 = vsel %vm456, %v452, 0.0
      %v463 = vadd.f32 %v461, %v462
      %464 = vadd.xlane.f32.xlu0 %v463
      %v465 = vpop.xlane.xlu0 %464
      %v466 = vmul.f32 %v451, %v451
      %v467 = vmul.f32 %v452, %v452
      %v468 = vsel %vm456, %v466, 0.0
      %v469 = vsel %vm456, %v467, 0.0
      %v470 = vadd.f32 %v468, %v469
      %471 = vadd.xlane.f32.xlu0 %v470
      %v472 = vpop.xlane.xlu0 %471
      %vm473 = vcmask 7168
      %v474 = vsel %vm473, %v465, %v472
      %v475 = vadd.f32 %v460, %v474
      %vm476 = vcmask 11264
      %477 = vst.msk [vmem:[%s264] sm:$0xf] %vm476, %v475
      %p478 = scmp.lt.s32.totalorder %s21, 1
      %s479 = scalar_select %p478, %s21, 1
      %s480 = smul.addr %s479, 4
      %s481 = scalar_lea.vmem %s4, %s480
      %s482 = smul.u32 2, %s22
      %p483 = scmp.lt.s32.totalorder %s21, 1
      %s484 = scalar_select %p483, %s21, 1
      %p485 = scmp.lt.s32.totalorder %s482, 1
      %s486 = scalar_select %p485, %s482, 1
      %s487 = smul.addr %s484, 2
      %s488 = sadd.s32 %s486, %s487
      %s489 = smul.addr %s488, 4
      %s490 = scalar_lea.vmem %s5, %s489
      // Predicated region
      $region41: #{pixel_map_estimator_bn.4} parent=35 // pred_check
        %p491 = pneg %p138
      $region42: #{pixel_map_estimator_bn.4} parent=35 // pred_check_branch
        %493 = sbr.rel (%p491) target = $region44
      $region43: #{pixel_map_estimator_bn.4} parent=35 // pred_region
        _
      $region44: #{pixel_map_estimator_bn.4} parent=35 // pred_fallthru
        _
      // Predicated region
      $region45: #{pixel_map_estimator_bn.4} parent=35 // pred_check
        %p494 = pneg %p166
      $region46: #{pixel_map_estimator_bn.4} parent=35 // pred_check_branch
        %496 = sbr.rel (%p494) target = $region48
      $region47: #{pixel_map_estimator_bn.4} parent=35 // pred_region
        %s497 = smul.u32 2, %s22
      $region48: #{pixel_map_estimator_bn.4} parent=35 // pred_fallthru
        _
    $region36: #{pixel_map_estimator_bn.4} parent=5 // pred_fallthru
      _
    %p498 = scmp.le.s32.totalorder 2, %s12
    // Predicated region
    $region49: #{pixel_map_estimator_bn.4} parent=5 // pred_check
      %p499 = pneg %p498
    $region50: #{pixel_map_estimator_bn.4} parent=5 // pred_check_branch
      %501 = sbr.rel (%p499) target = $region52
    $region51: #{pixel_map_estimator_bn.4} parent=5 // pred_region
      %s502 = ssub.s32 %s12, 2
      // Predicated region
      $region53: #{pixel_map_estimator_bn.4} parent=51 // pred_check
        %p503 = pneg %p144
      $region54: #{pixel_map_estimator_bn.4} parent=51 // pred_check_branch
        %505 = sbr.rel (%p503) target = $region56
      $region55: #{pixel_map_estimator_bn.4} parent=51 // pred_region
        %p506 = scmp.lt.s32.totalorder %s23, 1
        %s507 = scalar_select %p506, %s23, 1
        %s508 = smul.addr %s507, 4
        %s509 = scalar_lea.vmem %s4, %s508
      $region56: #{pixel_map_estimator_bn.4} parent=51 // pred_fallthru
        _
      // Predicated region
      $region57: #{pixel_map_estimator_bn.4} parent=51 // pred_check
        %p510 = pneg %p172
      $region58: #{pixel_map_estimator_bn.4} parent=51 // pred_check_branch
        %512 = sbr.rel (%p510) target = $region60
      $region59: #{pixel_map_estimator_bn.4} parent=51 // pred_region
        %s513 = smul.u32 2, %s24
        %p514 = scmp.lt.s32.totalorder %s23, 1
        %s515 = scalar_select %p514, %s23, 1
        %p516 = scmp.lt.s32.totalorder %s513, 1
        %s517 = scalar_select %p516, %s513, 1
        %s518 = smul.addr %s515, 2
        %s519 = sadd.s32 %s517, %s518
        %s520 = smul.addr %s519, 4
        %s521 = scalar_lea.vmem %s5, %s520
      $region60: #{pixel_map_estimator_bn.4} parent=51 // pred_fallthru
        _
    $region52: #{pixel_map_estimator_bn.4} parent=5 // pred_fallthru
      _
  $region6: #{pixel_map_estimator_bn.4} parent=0 // loop_footer
    %s16 = sadd.s32 1, %s12
  $region7: #{pixel_map_estimator_bn.4} parent=0 // loop_footer_branch
    %11 = sbr.rel target = $region3
  $region8: #{pixel_map_estimator_bn.4} parent=0 // loop_exit
    _

</llo_original>
